<compile_context>
chip_gen: v7x
topology: tpu7x:2x2x1
jax: 0.10.0
libtpu: 0.0.40
codegen_flags: <defaults>
</compile_context>

<pallas_src>
import functools
import math

import jax
import jax.numpy as jnp
import numpy as np
from jax.experimental import pallas as pl
from jax.experimental.pallas import tpu as pltpu


# ---------------------------------------------------------------- helpers ---
def _layernorm(x, g, b, eps=1e-5):
    # PyTorch nn.LayerNorm: biased variance, eps inside sqrt.
    mu = jnp.mean(x, axis=-1, keepdims=True)
    var = jnp.mean((x - mu) ** 2, axis=-1, keepdims=True)
    return (x - mu) * jax.lax.rsqrt(var + eps) * g + b


def _gelu(x):
    # nn.GELU() default = exact (erf) GELU.
    return 0.5 * x * (1.0 + jax.lax.erf(x * (1.0 / math.sqrt(2.0))))


# ----------------------------------------------------------------- kernel ---
def encoder_kernel(n_head, seq_len, mm_dtype, approx_recip,
                   x_ref,
                   g1_ref, be1_ref,
                   wqkv_ref, bqkv_ref,          # (D, 3D) mm_dtype, (1, 3D) f32 (scale folded into q part)
                   wo_ref, bo_ref,              # (D, D) mm_dtype,  (1, D) f32
                   g2_ref, be2_ref,
                   w1_ref, bf1_ref,             # (D, DFF) mm_dtype, (1, DFF) f32
                   w2_ref, bf2_ref,             # (DFF, D) mm_dtype, (1, D) f32
                   o_ref):
    x = x_ref[...].astype(jnp.float32)           # (M, D), M = Bt * S (batch folded into M)
    M, D = x.shape
    S = seq_len
    Bt = M // S
    H = n_head
    Dh = D // H

    # ---- sublayer 1: LayerNorm -> MultiheadAttention -> (+ residual) ----
    xn = _layernorm(x, g1_ref[...], be1_ref[...])                    # f32 (M, D)

    # Single full-width fused QKV projection: (M, D) @ (D, 3D), f32 accumulation.
    qkv = jnp.dot(xn.astype(mm_dtype), wqkv_ref[...],
                  preferred_element_type=jnp.float32) + bqkv_ref[...]  # (M, 3D) f32

    # Per-head attention (unrolled): only one head's (Bt, S, S) scores live at a time.
    # Attention is strictly per-example (batch folded back out of M before the scores).
    head_outs = []
    for h in range(H):
        qh = qkv[:, h * Dh:(h + 1) * Dh].astype(mm_dtype).reshape(Bt, S, Dh)
        kh = qkv[:, D + h * Dh:D + (h + 1) * Dh].astype(mm_dtype).reshape(Bt, S, Dh)
        vh = qkv[:, 2 * D + h * Dh:2 * D + (h + 1) * Dh].astype(mm_dtype).reshape(Bt, S, Dh)

        s = jnp.einsum("bqd,bkd->bqk", qh, kh,
                       preferred_element_type=jnp.float32)           # (Bt, S, S) f32
        m = jnp.max(s, axis=-1, keepdims=True)
        p = jnp.exp(s - m)
        l = jnp.sum(p, axis=-1, keepdims=True)                       # (Bt, S, 1)
        o = jnp.einsum("bqk,bkd->bqd", p.astype(mm_dtype), vh,
                       preferred_element_type=jnp.float32)           # (Bt, S, Dh) f32
        # Deferred softmax normalization on the small (Bt, S, Dh) tensor.
        if approx_recip:
            o = o * pl.reciprocal(l, approx=True)                    # EUP slot, off the VALU
        else:
            o = o / l
        head_outs.append(o.reshape(M, Dh))

    oc = jnp.concatenate(head_outs, axis=-1).astype(mm_dtype)        # (M, D)
    # Output projection: one full K=D matmul (== concat-heads @ W_o).
    attn = jnp.dot(oc, wo_ref[...],
                   preferred_element_type=jnp.float32) + bo_ref[...]
    # dropout (p=0.1) is identity in eval mode
    x1 = x + attn

    # ---- sublayer 2: LayerNorm -> Linear -> GELU -> Linear -> (+ residual) ----
    xn2 = _layernorm(x1, g2_ref[...], be2_ref[...])
    h1 = jnp.dot(xn2.astype(mm_dtype), w1_ref[...],
                 preferred_element_type=jnp.float32) + bf1_ref[...]  # (M, DFF) f32
    h1 = _gelu(h1).astype(mm_dtype)                                  # free the f32 temp early
    ff = jnp.dot(h1, w2_ref[...],
                 preferred_element_type=jnp.float32) + bf2_ref[...]
    # dropout1 / dropout2 are identity in eval mode
    o_ref[...] = (x1 + ff).astype(o_ref.dtype)


# ---------------------------------------------------------- tile heuristic ---
def _pick_batch_tile(B, S, D, DFF, mm_bytes, budget_bytes=16 * 1024 * 1024):
    """Largest divisor of B whose per-step activation working set fits the budget,
    preferring >= 2 grid steps (input/output DMA pipelining + megacore sharding).
    ~16 MiB keeps the per-step live set well under v7x's 64 MiB VMEM and inside
    v5e's raised scoped limit."""
    def act_bytes(bt):
        M = bt * S
        est = M * D * 4 * 3              # x, x1, attn (f32)
        est += M * 3 * D * 4             # fused qkv (f32)
        est += M * 3 * D * mm_bytes      # per-head matmul operand casts (upper bound)
        est += bt * S * S * 4 * 2        # one head's scores + probs (f32)
        est += M * D * (4 + mm_bytes)    # concatenated head outputs (f32 + cast)
        est += M * DFF * (4 + mm_bytes)  # FFN hidden (f32 pre-GELU + mm-dtype post)
        return est

    divs = [d for d in range(1, B + 1) if B % d == 0]
    # bt*S must be a multiple of 8 sublanes unless the block covers the whole batch.
    legal = [d for d in divs if d == B or (d * S) % 8 == 0]
    fitting = [d for d in legal if act_bytes(d) <= budget_bytes]
    multi = [d for d in fitting if B // d >= 2]
    if multi:
        return max(multi)
    if fitting:
        return max(fitting)
    return min(legal)


# ---------------------------------------------------------------- wrapper ---
def transformer_encoder(x, params, n_head, *, matmul_dtype=jnp.bfloat16,
                        approx_softmax_recip=None, batch_tile=None,
                        vmem_limit_bytes=48 * 1024 * 1024):
    """x: (B, S, D).  params (y = x @ W + b layout):
    [g1, be1, wq, wk, wv, bq, bk, bv, wo, bo, g2, be2, w1, bf1, w2, bf2]."""
    (g1, be1, wq, wk, wv, bq, bk, bv, wo, bo, g2, be2, w1, bf1, w2, bf2) = params
    B, S, D = x.shape
    H = n_head
    assert D % H == 0
    Dh = D // H
    DFF = w1.shape[1]
    f32 = jnp.float32
    mm_bytes = jnp.dtype(matmul_dtype).itemsize
    if approx_softmax_recip is None:
        # Approximate (EUP) reciprocal only on the reduced-precision fast path.
        approx_softmax_recip = jnp.dtype(matmul_dtype) != jnp.dtype(jnp.float32)

    bt = _pick_batch_tile(B, S, D, DFF, mm_bytes) if batch_tile is None else batch_tile
    assert B % bt == 0
    n_blocks = B // bt
    M = bt * S
    assert bt == B or M % 8 == 0, "batch_tile*seq must be a multiple of 8 sublanes"

    # Fold the attention scale into the q weight/bias; pack fused QKV (layout plumbing).
    scale = 1.0 / math.sqrt(Dh)
    wqkv = jnp.concatenate([wq * scale, wk, wv], axis=1).astype(matmul_dtype)  # (D, 3D)
    bqkv = jnp.concatenate([bq * scale, bk, bv], axis=1).astype(f32)           # (1, 3D)

    kparams = [g1.astype(f32), be1.astype(f32),
               wqkv, bqkv,
               wo.astype(matmul_dtype), bo.astype(f32),
               g2.astype(f32), be2.astype(f32),
               w1.astype(matmul_dtype), bf1.astype(f32),
               w2.astype(matmul_dtype), bf2.astype(f32)]

    # Fold batch * seq into the matmul M dimension.
    x2 = x.reshape(B * S, D)

    def _const_spec(p):
        return pl.BlockSpec(p.shape, lambda i, nd=p.ndim: (0,) * nd)

    in_specs = [pl.BlockSpec((M, D), lambda i: (i, 0))]
    in_specs += [_const_spec(p) for p in kparams]

    kern = functools.partial(encoder_kernel, H, S, matmul_dtype, approx_softmax_recip)
    out2 = pl.pallas_call(
        kern,
        out_shape=jax.ShapeDtypeStruct((B * S, D), x.dtype),
        grid_spec=pltpu.PrefetchScalarGridSpec(
            num_scalar_prefetch=0,
            grid=(n_blocks,),
            in_specs=in_specs,
            out_specs=pl.BlockSpec((M, D), lambda i: (i, 0)),
        ),
        compiler_params=pltpu.CompilerParams(
            dimension_semantics=("parallel",),        # batch tiles are independent
            vmem_limit_bytes=vmem_limit_bytes),
    )(x2, *kparams)
    return out2.reshape(B, S, D)


# --------------------------------------------------------------- reference ---
def transformer_encoder_ref(x, params, n_head):
    (g1, be1, wq, wk, wv, bq, bk, bv, wo, bo, g2, be2, w1, bf1, w2, bf2) = params
    B, S, D = x.shape
    H = n_head
    Dh = D // H
    scale = 1.0 / math.sqrt(Dh)

    xn = _layernorm(x, g1, be1)
    q = xn @ wq + bq
    k = xn @ wk + bk
    v = xn @ wv + bv
    q = q.reshape(B, S, H, Dh)
    k = k.reshape(B, S, H, Dh)
    v = v.reshape(B, S, H, Dh)
    s = jnp.einsum("bqhd,bkhd->bhqk", q, k) * scale
    p = jax.nn.softmax(s, axis=-1)
    ao = jnp.einsum("bhqk,bkhd->bqhd", p, v).reshape(B, S, D)
    attn = ao @ wo + bo
    x1 = x + attn
    xn2 = _layernorm(x1, g2, be2)
    ff = _gelu(xn2 @ w1 + bf1) @ w2 + bf2
    return x1 + ff


# ------------------------------------------------------------------- main ---
if __name__ == "__main__":
    B, S, D, H, DFF = 2, 8, 32, 4, 64  # d_model=32, n_head=4, d_ff=64

    key = jax.random.PRNGKey(0)
    keys = jax.random.split(key, 12)

    def xavier_normal(k, shape):
        fan_in, fan_out = shape[0], shape[1]
        std = math.sqrt(2.0 / (fan_in + fan_out))
        return (jax.random.normal(k, shape) * std).astype(jnp.float32)

    # Parameters stored so that y = x @ W + b (transposed vs. PyTorch (out, in) layout).
    g1  = jnp.ones((1, D), jnp.float32)
    be1 = jnp.zeros((1, D), jnp.float32)
    g2  = jnp.ones((1, D), jnp.float32)
    be2 = jnp.zeros((1, D), jnp.float32)

    wq = xavier_normal(keys[0], (D, D))
    wk = xavier_normal(keys[1], (D, D))
    wv = xavier_normal(keys[2], (D, D))
    bq = (0.01 * jax.random.normal(keys[3], (1, D))).astype(jnp.float32)
    bk = (0.01 * jax.random.normal(keys[4], (1, D))).astype(jnp.float32)
    bv = (0.01 * jax.random.normal(keys[5], (1, D))).astype(jnp.float32)
    wo = xavier_normal(keys[6], (D, D))
    bo = (0.01 * jax.random.normal(keys[7], (1, D))).astype(jnp.float32)

    w1  = xavier_normal(keys[8], (D, DFF))
    bf1 = (0.01 * jax.random.normal(keys[9], (1, DFF))).astype(jnp.float32)
    w2  = xavier_normal(keys[10], (DFF, D))
    bf2 = (0.01 * jax.random.normal(keys[11], (1, D))).astype(jnp.float32)

    params = [g1, be1, wq, wk, wv, bq, bk, bv, wo, bo, g2, be2, w1, bf1, w2, bf2]

    x = jax.random.normal(jax.random.PRNGKey(42), (B, S, D), dtype=jnp.float32)

    ref = jax.block_until_ready(transformer_encoder_ref(x, params, H))

    # f32 validation path (default MXU precision -> not bitwise; tight-ish tolerance).
    out_f32 = jax.block_until_ready(
        transformer_encoder(x, params, H, matmul_dtype=jnp.float32))
    np.testing.assert_allclose(np.asarray(out_f32), np.asarray(ref), rtol=1e-3, atol=1e-3)

    # Default fast path: bf16 MXU operands, f32 accumulation, f32 LN/softmax/GELU,
    # EUP approximate softmax reciprocal.
    out_bf16 = jax.block_until_ready(transformer_encoder(x, params, H))
    np.testing.assert_allclose(np.asarray(out_bf16), np.asarray(ref), rtol=5e-2, atol=1e-1)

    print("KERNEL_OK")
</pallas_src>

<mosaic_0001>
module attributes {stable_mosaic.version = 11 : i64} {
  func.func @encoder_kernel(%arg0: i32, %arg1: memref<8x32xf32, #tpu.memory_space<vmem>>, %arg2: memref<1x32xf32, #tpu.memory_space<vmem>>, %arg3: memref<1x32xf32, #tpu.memory_space<vmem>>, %arg4: memref<32x96xf32, #tpu.memory_space<vmem>>, %arg5: memref<1x96xf32, #tpu.memory_space<vmem>>, %arg6: memref<32x32xf32, #tpu.memory_space<vmem>>, %arg7: memref<1x32xf32, #tpu.memory_space<vmem>>, %arg8: memref<1x32xf32, #tpu.memory_space<vmem>>, %arg9: memref<1x32xf32, #tpu.memory_space<vmem>>, %arg10: memref<32x64xf32, #tpu.memory_space<vmem>>, %arg11: memref<1x64xf32, #tpu.memory_space<vmem>>, %arg12: memref<64x32xf32, #tpu.memory_space<vmem>>, %arg13: memref<1x32xf32, #tpu.memory_space<vmem>>, %arg14: memref<8x32xf32, #tpu.memory_space<vmem>>) attributes {dimension_semantics = [#tpu.dimension_semantics<parallel>], iteration_bounds = array<i64: 2>, scalar_prefetch = 0 : i64, scratch_operands = 0 : i64, tpu.core_type = #tpu.core_type<tc>, window_params = [{transform_indices = @transform_0, window_bounds = array<i64: 8, 32>}, {pipeline_mode = #tpu.pipeline_mode<synchronous>, transform_indices = @transform_1, window_bounds = array<i64: 1, 32>}, {pipeline_mode = #tpu.pipeline_mode<synchronous>, transform_indices = @transform_2, window_bounds = array<i64: 1, 32>}, {pipeline_mode = #tpu.pipeline_mode<synchronous>, transform_indices = @transform_3, window_bounds = array<i64: 32, 96>}, {pipeline_mode = #tpu.pipeline_mode<synchronous>, transform_indices = @transform_4, window_bounds = array<i64: 1, 96>}, {pipeline_mode = #tpu.pipeline_mode<synchronous>, transform_indices = @transform_5, window_bounds = array<i64: 32, 32>}, {pipeline_mode = #tpu.pipeline_mode<synchronous>, transform_indices = @transform_6, window_bounds = array<i64: 1, 32>}, {pipeline_mode = #tpu.pipeline_mode<synchronous>, transform_indices = @transform_7, window_bounds = array<i64: 1, 32>}, {pipeline_mode = #tpu.pipeline_mode<synchronous>, transform_indices = @transform_8, window_bounds = array<i64: 1, 32>}, {pipeline_mode = #tpu.pipeline_mode<synchronous>, transform_indices = @transform_9, window_bounds = array<i64: 32, 64>}, {pipeline_mode = #tpu.pipeline_mode<synchronous>, transform_indices = @transform_10, window_bounds = array<i64: 1, 64>}, {pipeline_mode = #tpu.pipeline_mode<synchronous>, transform_indices = @transform_11, window_bounds = array<i64: 64, 32>}, {pipeline_mode = #tpu.pipeline_mode<synchronous>, transform_indices = @transform_12, window_bounds = array<i64: 1, 32>}, {transform_indices = @transform_13, window_bounds = array<i64: 8, 32>}]} {
    %c0 = arith.constant 0 : index
    %c0_0 = arith.constant 0 : index
    %0 = vector.load %arg1[%c0, %c0_0] : memref<8x32xf32, #tpu.memory_space<vmem>>, vector<8x32xf32>
    %c0_1 = arith.constant 0 : index
    %c0_2 = arith.constant 0 : index
    %1 = vector.load %arg2[%c0_1, %c0_2] : memref<1x32xf32, #tpu.memory_space<vmem>>, vector<1x32xf32>
    %c0_3 = arith.constant 0 : index
    %c0_4 = arith.constant 0 : index
    %2 = vector.load %arg3[%c0_3, %c0_4] : memref<1x32xf32, #tpu.memory_space<vmem>>, vector<1x32xf32>
    %cst = arith.constant dense<0.000000e+00> : vector<8xf32>
    %3 = vector.multi_reduction <add>, %0, %cst [1] : vector<8x32xf32> to vector<8xf32>
    %4 = vector.shape_cast %3 : vector<8xf32> to vector<8x1xf32>
    %cst_5 = arith.constant 3.200000e+01 : f32
    %5 = vector.broadcast %cst_5 : f32 to vector<8x1xf32>
    %6 = arith.divf %4, %5 : vector<8x1xf32>
    %7 = vector.broadcast %6 : vector<8x1xf32> to vector<8x32xf32>
    %8 = arith.subf %0, %7 : vector<8x32xf32>
    %9 = arith.mulf %8, %8 : vector<8x32xf32>
    %cst_6 = arith.constant dense<0.000000e+00> : vector<8xf32>
    %10 = vector.multi_reduction <add>, %9, %cst_6 [1] : vector<8x32xf32> to vector<8xf32>
    %11 = vector.shape_cast %10 : vector<8xf32> to vector<8x1xf32>
    %cst_7 = arith.constant 3.200000e+01 : f32
    %12 = vector.broadcast %cst_7 : f32 to vector<8x1xf32>
    %13 = arith.divf %11, %12 : vector<8x1xf32>
    %14 = vector.broadcast %6 : vector<8x1xf32> to vector<8x32xf32>
    %15 = arith.subf %0, %14 : vector<8x32xf32>
    %cst_8 = arith.constant 9.99999974E-6 : f32
    %16 = vector.broadcast %cst_8 : f32 to vector<8x1xf32>
    %17 = arith.addf %13, %16 : vector<8x1xf32>
    %18 = math.rsqrt %17 : vector<8x1xf32>
    %19 = vector.broadcast %18 : vector<8x1xf32> to vector<8x32xf32>
    %20 = arith.mulf %15, %19 : vector<8x32xf32>
    %21 = vector.broadcast %1 : vector<1x32xf32> to vector<8x32xf32>
    %22 = arith.mulf %20, %21 : vector<8x32xf32>
    %23 = vector.broadcast %2 : vector<1x32xf32> to vector<8x32xf32>
    %24 = arith.addf %22, %23 : vector<8x32xf32>
    %c0_9 = arith.constant 0 : index
    %c0_10 = arith.constant 0 : index
    %25 = vector.load %arg4[%c0_9, %c0_10] : memref<32x96xf32, #tpu.memory_space<vmem>>, vector<32x96xf32>
    %cst_11 = arith.constant dense<0.000000e+00> : vector<8x96xf32>
    %26 = tpu.matmul %24, %25, %cst_11 {dimension_numbers = #tpu.dot_dimension_numbers<[1], [0], [0], [1], [0, 0, 1, 1], [], []>} : vector<8x32xf32>, vector<32x96xf32>, vector<8x96xf32> -> vector<8x96xf32>
    %c0_12 = arith.constant 0 : index
    %c0_13 = arith.constant 0 : index
    %27 = vector.load %arg5[%c0_12, %c0_13] : memref<1x96xf32, #tpu.memory_space<vmem>>, vector<1x96xf32>
    %28 = vector.broadcast %27 : vector<1x96xf32> to vector<8x96xf32>
    %29 = arith.addf %26, %28 : vector<8x96xf32>
    %30 = vector.extract_strided_slice %29 {offsets = [0, 0], sizes = [8, 8], strides = [1, 1]} : vector<8x96xf32> to vector<8x8xf32>
    %31 = vector.shape_cast %30 : vector<8x8xf32> to vector<1x8x8xf32>
    %32 = vector.extract_strided_slice %29 {offsets = [0, 32], sizes = [8, 8], strides = [1, 1]} : vector<8x96xf32> to vector<8x8xf32>
    %33 = vector.shape_cast %32 : vector<8x8xf32> to vector<1x8x8xf32>
    %34 = vector.extract_strided_slice %29 {offsets = [0, 64], sizes = [8, 8], strides = [1, 1]} : vector<8x96xf32> to vector<8x8xf32>
    %35 = vector.shape_cast %34 : vector<8x8xf32> to vector<1x8x8xf32>
    "tpu.trace_start"() <{level = 10 : i32, message = "bqd,bkd->bqk"}> : () -> ()
    %cst_14 = arith.constant dense<0.000000e+00> : vector<1x8x8xf32>
    %36 = tpu.matmul %31, %33, %cst_14 {dimension_numbers = #tpu.dot_dimension_numbers<[2], [2], [1], [1], [0, 0, 0, 1, 1, 1], [0], [0]>} : vector<1x8x8xf32>, vector<1x8x8xf32>, vector<1x8x8xf32> -> vector<1x8x8xf32>
    "tpu.trace_stop"() : () -> ()
    %cst_15 = arith.constant dense<0xFF800000> : vector<1x8xf32>
    %37 = vector.multi_reduction <maximumf>, %36, %cst_15 [2] : vector<1x8x8xf32> to vector<1x8xf32>
    %38 = vector.shape_cast %37 : vector<1x8xf32> to vector<1x8x1xf32>
    %39 = vector.broadcast %38 : vector<1x8x1xf32> to vector<1x8x8xf32>
    %40 = arith.subf %36, %39 : vector<1x8x8xf32>
    %41 = math.exp %40 : vector<1x8x8xf32>
    %cst_16 = arith.constant dense<0.000000e+00> : vector<1x8xf32>
    %42 = vector.multi_reduction <add>, %41, %cst_16 [2] : vector<1x8x8xf32> to vector<1x8xf32>
    %43 = vector.shape_cast %42 : vector<1x8xf32> to vector<1x8x1xf32>
    "tpu.trace_start"() <{level = 10 : i32, message = "bqk,bkd->bqd"}> : () -> ()
    %cst_17 = arith.constant dense<0.000000e+00> : vector<1x8x8xf32>
    %44 = tpu.matmul %41, %35, %cst_17 {dimension_numbers = #tpu.dot_dimension_numbers<[2], [1], [1], [2], [0, 0, 0, 1, 1, 2], [0], [0]>} : vector<1x8x8xf32>, vector<1x8x8xf32>, vector<1x8x8xf32> -> vector<1x8x8xf32>
    "tpu.trace_stop"() : () -> ()
    %45 = vector.broadcast %43 : vector<1x8x1xf32> to vector<1x8x8xf32>
    %46 = arith.divf %44, %45 : vector<1x8x8xf32>
    %47 = vector.shape_cast %46 : vector<1x8x8xf32> to vector<8x8xf32>
    %48 = vector.extract_strided_slice %29 {offsets = [0, 8], sizes = [8, 8], strides = [1, 1]} : vector<8x96xf32> to vector<8x8xf32>
    %49 = vector.shape_cast %48 : vector<8x8xf32> to vector<1x8x8xf32>
    %50 = vector.extract_strided_slice %29 {offsets = [0, 40], sizes = [8, 8], strides = [1, 1]} : vector<8x96xf32> to vector<8x8xf32>
    %51 = vector.shape_cast %50 : vector<8x8xf32> to vector<1x8x8xf32>
    %52 = vector.extract_strided_slice %29 {offsets = [0, 72], sizes = [8, 8], strides = [1, 1]} : vector<8x96xf32> to vector<8x8xf32>
    %53 = vector.shape_cast %52 : vector<8x8xf32> to vector<1x8x8xf32>
    "tpu.trace_start"() <{level = 10 : i32, message = "bqd,bkd->bqk"}> : () -> ()
    %cst_18 = arith.constant dense<0.000000e+00> : vector<1x8x8xf32>
    %54 = tpu.matmul %49, %51, %cst_18 {dimension_numbers = #tpu.dot_dimension_numbers<[2], [2], [1], [1], [0, 0, 0, 1, 1, 1], [0], [0]>} : vector<1x8x8xf32>, vector<1x8x8xf32>, vector<1x8x8xf32> -> vector<1x8x8xf32>
    "tpu.trace_stop"() : () -> ()
    %cst_19 = arith.constant dense<0xFF800000> : vector<1x8xf32>
    %55 = vector.multi_reduction <maximumf>, %54, %cst_19 [2] : vector<1x8x8xf32> to vector<1x8xf32>
    %56 = vector.shape_cast %55 : vector<1x8xf32> to vector<1x8x1xf32>
    %57 = vector.broadcast %56 : vector<1x8x1xf32> to vector<1x8x8xf32>
    %58 = arith.subf %54, %57 : vector<1x8x8xf32>
    %59 = math.exp %58 : vector<1x8x8xf32>
    %cst_20 = arith.constant dense<0.000000e+00> : vector<1x8xf32>
    %60 = vector.multi_reduction <add>, %59, %cst_20 [2] : vector<1x8x8xf32> to vector<1x8xf32>
    %61 = vector.shape_cast %60 : vector<1x8xf32> to vector<1x8x1xf32>
    "tpu.trace_start"() <{level = 10 : i32, message = "bqk,bkd->bqd"}> : () -> ()
    %cst_21 = arith.constant dense<0.000000e+00> : vector<1x8x8xf32>
    %62 = tpu.matmul %59, %53, %cst_21 {dimension_numbers = #tpu.dot_dimension_numbers<[2], [1], [1], [2], [0, 0, 0, 1, 1, 2], [0], [0]>} : vector<1x8x8xf32>, vector<1x8x8xf32>, vector<1x8x8xf32> -> vector<1x8x8xf32>
    "tpu.trace_stop"() : () -> ()
    %63 = vector.broadcast %61 : vector<1x8x1xf32> to vector<1x8x8xf32>
    %64 = arith.divf %62, %63 : vector<1x8x8xf32>
    %65 = vector.shape_cast %64 : vector<1x8x8xf32> to vector<8x8xf32>
    %66 = vector.extract_strided_slice %29 {offsets = [0, 16], sizes = [8, 8], strides = [1, 1]} : vector<8x96xf32> to vector<8x8xf32>
    %67 = vector.shape_cast %66 : vector<8x8xf32> to vector<1x8x8xf32>
    %68 = vector.extract_strided_slice %29 {offsets = [0, 48], sizes = [8, 8], strides = [1, 1]} : vector<8x96xf32> to vector<8x8xf32>
    %69 = vector.shape_cast %68 : vector<8x8xf32> to vector<1x8x8xf32>
    %70 = vector.extract_strided_slice %29 {offsets = [0, 80], sizes = [8, 8], strides = [1, 1]} : vector<8x96xf32> to vector<8x8xf32>
    %71 = vector.shape_cast %70 : vector<8x8xf32> to vector<1x8x8xf32>
    "tpu.trace_start"() <{level = 10 : i32, message = "bqd,bkd->bqk"}> : () -> ()
    %cst_22 = arith.constant dense<0.000000e+00> : vector<1x8x8xf32>
    %72 = tpu.matmul %67, %69, %cst_22 {dimension_numbers = #tpu.dot_dimension_numbers<[2], [2], [1], [1], [0, 0, 0, 1, 1, 1], [0], [0]>} : vector<1x8x8xf32>, vector<1x8x8xf32>, vector<1x8x8xf32> -> vector<1x8x8xf32>
    "tpu.trace_stop"() : () -> ()
    %cst_23 = arith.constant dense<0xFF800000> : vector<1x8xf32>
    %73 = vector.multi_reduction <maximumf>, %72, %cst_23 [2] : vector<1x8x8xf32> to vector<1x8xf32>
    %74 = vector.shape_cast %73 : vector<1x8xf32> to vector<1x8x1xf32>
    %75 = vector.broadcast %74 : vector<1x8x1xf32> to vector<1x8x8xf32>
    %76 = arith.subf %72, %75 : vector<1x8x8xf32>
    %77 = math.exp %76 : vector<1x8x8xf32>
    %cst_24 = arith.constant dense<0.000000e+00> : vector<1x8xf32>
    %78 = vector.multi_reduction <add>, %77, %cst_24 [2] : vector<1x8x8xf32> to vector<1x8xf32>
    %79 = vector.shape_cast %78 : vector<1x8xf32> to vector<1x8x1xf32>
    "tpu.trace_start"() <{level = 10 : i32, message = "bqk,bkd->bqd"}> : () -> ()
    %cst_25 = arith.constant dense<0.000000e+00> : vector<1x8x8xf32>
    %80 = tpu.matmul %77, %71, %cst_25 {dimension_numbers = #tpu.dot_dimension_numbers<[2], [1], [1], [2], [0, 0, 0, 1, 1, 2], [0], [0]>} : vector<1x8x8xf32>, vector<1x8x8xf32>, vector<1x8x8xf32> -> vector<1x8x8xf32>
    "tpu.trace_stop"() : () -> ()
    %81 = vector.broadcast %79 : vector<1x8x1xf32> to vector<1x8x8xf32>
    %82 = arith.divf %80, %81 : vector<1x8x8xf32>
    %83 = vector.shape_cast %82 : vector<1x8x8xf32> to vector<8x8xf32>
    %84 = vector.extract_strided_slice %29 {offsets = [0, 24], sizes = [8, 8], strides = [1, 1]} : vector<8x96xf32> to vector<8x8xf32>
    %85 = vector.shape_cast %84 : vector<8x8xf32> to vector<1x8x8xf32>
    %86 = vector.extract_strided_slice %29 {offsets = [0, 56], sizes = [8, 8], strides = [1, 1]} : vector<8x96xf32> to vector<8x8xf32>
    %87 = vector.shape_cast %86 : vector<8x8xf32> to vector<1x8x8xf32>
    %88 = vector.extract_strided_slice %29 {offsets = [0, 88], sizes = [8, 8], strides = [1, 1]} : vector<8x96xf32> to vector<8x8xf32>
    %89 = vector.shape_cast %88 : vector<8x8xf32> to vector<1x8x8xf32>
    "tpu.trace_start"() <{level = 10 : i32, message = "bqd,bkd->bqk"}> : () -> ()
    %cst_26 = arith.constant dense<0.000000e+00> : vector<1x8x8xf32>
    %90 = tpu.matmul %85, %87, %cst_26 {dimension_numbers = #tpu.dot_dimension_numbers<[2], [2], [1], [1], [0, 0, 0, 1, 1, 1], [0], [0]>} : vector<1x8x8xf32>, vector<1x8x8xf32>, vector<1x8x8xf32> -> vector<1x8x8xf32>
    "tpu.trace_stop"() : () -> ()
    %cst_27 = arith.constant dense<0xFF800000> : vector<1x8xf32>
    %91 = vector.multi_reduction <maximumf>, %90, %cst_27 [2] : vector<1x8x8xf32> to vector<1x8xf32>
    %92 = vector.shape_cast %91 : vector<1x8xf32> to vector<1x8x1xf32>
    %93 = vector.broadcast %92 : vector<1x8x1xf32> to vector<1x8x8xf32>
    %94 = arith.subf %90, %93 : vector<1x8x8xf32>
    %95 = math.exp %94 : vector<1x8x8xf32>
    %cst_28 = arith.constant dense<0.000000e+00> : vector<1x8xf32>
    %96 = vector.multi_reduction <add>, %95, %cst_28 [2] : vector<1x8x8xf32> to vector<1x8xf32>
    %97 = vector.shape_cast %96 : vector<1x8xf32> to vector<1x8x1xf32>
    "tpu.trace_start"() <{level = 10 : i32, message = "bqk,bkd->bqd"}> : () -> ()
    %cst_29 = arith.constant dense<0.000000e+00> : vector<1x8x8xf32>
    %98 = tpu.matmul %95, %89, %cst_29 {dimension_numbers = #tpu.dot_dimension_numbers<[2], [1], [1], [2], [0, 0, 0, 1, 1, 2], [0], [0]>} : vector<1x8x8xf32>, vector<1x8x8xf32>, vector<1x8x8xf32> -> vector<1x8x8xf32>
    "tpu.trace_stop"() : () -> ()
    %99 = vector.broadcast %97 : vector<1x8x1xf32> to vector<1x8x8xf32>
    %100 = arith.divf %98, %99 : vector<1x8x8xf32>
    %101 = vector.shape_cast %100 : vector<1x8x8xf32> to vector<8x8xf32>
    %102 = tpu.concatenate %47, %65, %83, %101 in 1 : vector<8x8xf32>, vector<8x8xf32>, vector<8x8xf32>, vector<8x8xf32> -> vector<8x32xf32>
    %c0_30 = arith.constant 0 : index
    %c0_31 = arith.constant 0 : index
    %103 = vector.load %arg6[%c0_30, %c0_31] : memref<32x32xf32, #tpu.memory_space<vmem>>, vector<32x32xf32>
    %cst_32 = arith.constant dense<0.000000e+00> : vector<8x32xf32>
    %104 = tpu.matmul %102, %103, %cst_32 {dimension_numbers = #tpu.dot_dimension_numbers<[1], [0], [0], [1], [0, 0, 1, 1], [], []>} : vector<8x32xf32>, vector<32x32xf32>, vector<8x32xf32> -> vector<8x32xf32>
    %c0_33 = arith.constant 0 : index
    %c0_34 = arith.constant 0 : index
    %105 = vector.load %arg7[%c0_33, %c0_34] : memref<1x32xf32, #tpu.memory_space<vmem>>, vector<1x32xf32>
    %106 = vector.broadcast %105 : vector<1x32xf32> to vector<8x32xf32>
    %107 = arith.addf %104, %106 : vector<8x32xf32>
    %108 = arith.addf %0, %107 : vector<8x32xf32>
    %c0_35 = arith.constant 0 : index
    %c0_36 = arith.constant 0 : index
    %109 = vector.load %arg8[%c0_35, %c0_36] : memref<1x32xf32, #tpu.memory_space<vmem>>, vector<1x32xf32>
    %c0_37 = arith.constant 0 : index
    %c0_38 = arith.constant 0 : index
    %110 = vector.load %arg9[%c0_37, %c0_38] : memref<1x32xf32, #tpu.memory_space<vmem>>, vector<1x32xf32>
    %cst_39 = arith.constant dense<0.000000e+00> : vector<8xf32>
    %111 = vector.multi_reduction <add>, %108, %cst_39 [1] : vector<8x32xf32> to vector<8xf32>
    %112 = vector.shape_cast %111 : vector<8xf32> to vector<8x1xf32>
    %cst_40 = arith.constant 3.200000e+01 : f32
    %113 = vector.broadcast %cst_40 : f32 to vector<8x1xf32>
    %114 = arith.divf %112, %113 : vector<8x1xf32>
    %115 = vector.broadcast %114 : vector<8x1xf32> to vector<8x32xf32>
    %116 = arith.subf %108, %115 : vector<8x32xf32>
    %117 = arith.mulf %116, %116 : vector<8x32xf32>
    %cst_41 = arith.constant dense<0.000000e+00> : vector<8xf32>
    %118 = vector.multi_reduction <add>, %117, %cst_41 [1] : vector<8x32xf32> to vector<8xf32>
    %119 = vector.shape_cast %118 : vector<8xf32> to vector<8x1xf32>
    %cst_42 = arith.constant 3.200000e+01 : f32
    %120 = vector.broadcast %cst_42 : f32 to vector<8x1xf32>
    %121 = arith.divf %119, %120 : vector<8x1xf32>
    %122 = vector.broadcast %114 : vector<8x1xf32> to vector<8x32xf32>
    %123 = arith.subf %108, %122 : vector<8x32xf32>
    %cst_43 = arith.constant 9.99999974E-6 : f32
    %124 = vector.broadcast %cst_43 : f32 to vector<8x1xf32>
    %125 = arith.addf %121, %124 : vector<8x1xf32>
    %126 = math.rsqrt %125 : vector<8x1xf32>
    %127 = vector.broadcast %126 : vector<8x1xf32> to vector<8x32xf32>
    %128 = arith.mulf %123, %127 : vector<8x32xf32>
    %129 = vector.broadcast %109 : vector<1x32xf32> to vector<8x32xf32>
    %130 = arith.mulf %128, %129 : vector<8x32xf32>
    %131 = vector.broadcast %110 : vector<1x32xf32> to vector<8x32xf32>
    %132 = arith.addf %130, %131 : vector<8x32xf32>
    %c0_44 = arith.constant 0 : index
    %c0_45 = arith.constant 0 : index
    %133 = vector.load %arg10[%c0_44, %c0_45] : memref<32x64xf32, #tpu.memory_space<vmem>>, vector<32x64xf32>
    %cst_46 = arith.constant dense<0.000000e+00> : vector<8x64xf32>
    %134 = tpu.matmul %132, %133, %cst_46 {dimension_numbers = #tpu.dot_dimension_numbers<[1], [0], [0], [1], [0, 0, 1, 1], [], []>} : vector<8x32xf32>, vector<32x64xf32>, vector<8x64xf32> -> vector<8x64xf32>
    %c0_47 = arith.constant 0 : index
    %c0_48 = arith.constant 0 : index
    %135 = vector.load %arg11[%c0_47, %c0_48] : memref<1x64xf32, #tpu.memory_space<vmem>>, vector<1x64xf32>
    %136 = vector.broadcast %135 : vector<1x64xf32> to vector<8x64xf32>
    %137 = arith.addf %134, %136 : vector<8x64xf32>
    %cst_49 = arith.constant 5.000000e-01 : f32
    %138 = vector.broadcast %cst_49 : f32 to vector<8x64xf32>
    %139 = arith.mulf %138, %137 : vector<8x64xf32>
    %cst_50 = arith.constant 0.707106769 : f32
    %140 = vector.broadcast %cst_50 : f32 to vector<8x64xf32>
    %141 = arith.mulf %137, %140 : vector<8x64xf32>
    %142 = math.erf %141 : vector<8x64xf32>
    %cst_51 = arith.constant 1.000000e+00 : f32
    %143 = vector.broadcast %cst_51 : f32 to vector<8x64xf32>
    %144 = arith.addf %143, %142 : vector<8x64xf32>
    %145 = arith.mulf %139, %144 : vector<8x64xf32>
    %c0_52 = arith.constant 0 : index
    %c0_53 = arith.constant 0 : index
    %146 = vector.load %arg12[%c0_52, %c0_53] : memref<64x32xf32, #tpu.memory_space<vmem>>, vector<64x32xf32>
    %cst_54 = arith.constant dense<0.000000e+00> : vector<8x32xf32>
    %147 = tpu.matmul %145, %146, %cst_54 {dimension_numbers = #tpu.dot_dimension_numbers<[1], [0], [0], [1], [0, 0, 1, 1], [], []>} : vector<8x64xf32>, vector<64x32xf32>, vector<8x32xf32> -> vector<8x32xf32>
    %c0_55 = arith.constant 0 : index
    %c0_56 = arith.constant 0 : index
    %148 = vector.load %arg13[%c0_55, %c0_56] : memref<1x32xf32, #tpu.memory_space<vmem>>, vector<1x32xf32>
    %149 = vector.broadcast %148 : vector<1x32xf32> to vector<8x32xf32>
    %150 = arith.addf %147, %149 : vector<8x32xf32>
    %151 = arith.addf %108, %150 : vector<8x32xf32>
    %c0_57 = arith.constant 0 : index
    %c0_58 = arith.constant 0 : index
    %152 = vector.load %arg14[%c0_57, %c0_58] : memref<8x32xf32, #tpu.memory_space<vmem>>, vector<8x32xf32>
    tpu.vector_store %arg14[%c0_57, %c0_58], %151 {strides = array<i32>} : memref<8x32xf32, #tpu.memory_space<vmem>>, vector<8x32xf32>,
    return
  }
  func.func @transform_0(%arg0: i32) -> (i32, i32) {
    %c0_i32 = arith.constant 0 : i32
    %c0_i32_0 = arith.constant 0 : i32
    return %arg0, %c0_i32 : i32, i32
  }
  func.func @transform_1(%arg0: i32) -> (i32, i32) {
    %c0_i32 = arith.constant 0 : i32
    %c0_i32_0 = arith.constant 0 : i32
    %c0_i32_1 = arith.constant 0 : i32
    return %c0_i32, %c0_i32_0 : i32, i32
  }
  func.func @transform_2(%arg0: i32) -> (i32, i32) {
    %c0_i32 = arith.constant 0 : i32
    %c0_i32_0 = arith.constant 0 : i32
    %c0_i32_1 = arith.constant 0 : i32
    return %c0_i32, %c0_i32_0 : i32, i32
  }
  func.func @transform_3(%arg0: i32) -> (i32, i32) {
    %c0_i32 = arith.constant 0 : i32
    %c0_i32_0 = arith.constant 0 : i32
    %c0_i32_1 = arith.constant 0 : i32
    return %c0_i32, %c0_i32_0 : i32, i32
  }
  func.func @transform_4(%arg0: i32) -> (i32, i32) {
    %c0_i32 = arith.constant 0 : i32
    %c0_i32_0 = arith.constant 0 : i32
    %c0_i32_1 = arith.constant 0 : i32
    return %c0_i32, %c0_i32_0 : i32, i32
  }
  func.func @transform_5(%arg0: i32) -> (i32, i32) {
    %c0_i32 = arith.constant 0 : i32
    %c0_i32_0 = arith.constant 0 : i32
    %c0_i32_1 = arith.constant 0 : i32
    return %c0_i32, %c0_i32_0 : i32, i32
  }
  func.func @transform_6(%arg0: i32) -> (i32, i32) {
    %c0_i32 = arith.constant 0 : i32
    %c0_i32_0 = arith.constant 0 : i32
    %c0_i32_1 = arith.constant 0 : i32
    return %c0_i32, %c0_i32_0 : i32, i32
  }
  func.func @transform_7(%arg0: i32) -> (i32, i32) {
    %c0_i32 = arith.constant 0 : i32
    %c0_i32_0 = arith.constant 0 : i32
    %c0_i32_1 = arith.constant 0 : i32
    return %c0_i32, %c0_i32_0 : i32, i32
  }
  func.func @transform_8(%arg0: i32) -> (i32, i32) {
    %c0_i32 = arith.constant 0 : i32
    %c0_i32_0 = arith.constant 0 : i32
    %c0_i32_1 = arith.constant 0 : i32
    return %c0_i32, %c0_i32_0 : i32, i32
  }
  func.func @transform_9(%arg0: i32) -> (i32, i32) {
    %c0_i32 = arith.constant 0 : i32
    %c0_i32_0 = arith.constant 0 : i32
    %c0_i32_1 = arith.constant 0 : i32
    return %c0_i32, %c0_i32_0 : i32, i32
  }
  func.func @transform_10(%arg0: i32) -> (i32, i32) {
    %c0_i32 = arith.constant 0 : i32
    %c0_i32_0 = arith.constant 0 : i32
    %c0_i32_1 = arith.constant 0 : i32
    return %c0_i32, %c0_i32_0 : i32, i32
  }
  func.func @transform_11(%arg0: i32) -> (i32, i32) {
    %c0_i32 = arith.constant 0 : i32
    %c0_i32_0 = arith.constant 0 : i32
    %c0_i32_1 = arith.constant 0 : i32
    return %c0_i32, %c0_i32_0 : i32, i32
  }
  func.func @transform_12(%arg0: i32) -> (i32, i32) {
    %c0_i32 = arith.constant 0 : i32
    %c0_i32_0 = arith.constant 0 : i32
    %c0_i32_1 = arith.constant 0 : i32
    return %c0_i32, %c0_i32_0 : i32, i32
  }
  func.func @transform_13(%arg0: i32) -> (i32, i32) {
    %c0_i32 = arith.constant 0 : i32
    %c0_i32_0 = arith.constant 0 : i32
    return %arg0, %c0_i32 : i32, i32
  }
}

</mosaic_0001>

<llo_original>
// kernel: tpu_custom_call.1
$region0: #{tpu_custom_call.1}
  #allocation0 [shape = 'u32[]', space=smem, size = 0x4, offset = 0x4, fixed_abs, tag = 'smem constant byte address 0x4 - core index']
  #allocation1 [shape = 'u32[144,128]{1,0:T(1,128)}', space=vmem, size = 0x12000, scoped, tag = 'internal scratch']
  %s0 = inlined_call_operand.hbm [shape: f32[16,32], index: 0, kind: input, shape index: {}]
  %s1 = inlined_call_operand.vmem [shape: f32[1,32], index: 1, kind: input, shape index: {}]
  %s2 = inlined_call_operand.vmem [shape: f32[1,32], index: 2, kind: input, shape index: {}]
  %s3 = inlined_call_operand.vmem [shape: f32[32,96], index: 3, kind: input, shape index: {}]
  %s4 = inlined_call_operand.vmem [shape: f32[1,96], index: 4, kind: input, shape index: {}]
  %s5 = inlined_call_operand.vmem [shape: f32[32,32], index: 5, kind: input, shape index: {}]
  %s6 = inlined_call_operand.vmem [shape: f32[1,32], index: 6, kind: input, shape index: {}]
  %s7 = inlined_call_operand.vmem [shape: f32[1,32], index: 7, kind: input, shape index: {}]
  %s8 = inlined_call_operand.vmem [shape: f32[1,32], index: 8, kind: input, shape index: {}]
  %s9 = inlined_call_operand.vmem [shape: f32[32,64], index: 9, kind: input, shape index: {}]
  %s10 = inlined_call_operand.vmem [shape: f32[1,64], index: 10, kind: input, shape index: {}]
  %s11 = inlined_call_operand.vmem [shape: f32[64,32], index: 11, kind: input, shape index: {}]
  %s12 = inlined_call_operand.vmem [shape: f32[1,32], index: 12, kind: input, shape index: {}]
  %s13 = inlined_call_operand.hbm [shape: f32[16,32], index: 13, kind: output, shape index: {}]
  %s14 = sld [smem:[#allocation0]]
  $region89: #{tpu_custom_call.1} parent=0
    _
  %s16 = ssub.s32 1, %s14
  %s17 = scalar_select 0, %s16, %s14
  $region1: #{tpu_custom_call.1} parent=0
    #allocation2 [shape = 'u8[8192]{0}', space=vmem, size = 0x2000, scoped, tag = 'input window, operand 0']
    #allocation3 [shape = 's32[2]{0}', space=sflag, size = 0x8, scoped, tag = 'scoped memory for tpu_custom_call.1']
    #allocation4 [shape = 's32[2]{0}', space=sflag, size = 0x8, scoped, tag = 'scoped memory for tpu_custom_call.1']
    #allocation5 [shape = 'u8[8192]{0}', space=vmem, size = 0x2000, scoped, tag = 'output window, operand 0']
    %18 = vsyncpa [#allocation3], 0
    %s19 = scalar_lea.sflag [#allocation3], 1
    %20 = vsyncpa %s19, 0
    %21 = vsyncpa [#allocation4], 0
    %s22 = scalar_lea.sflag [#allocation4], 1
    %23 = vsyncpa %s22, 0
    loop: start=0, step=1, limit=4
    $region2: #{tpu_custom_call.1} parent=1 // loop_pre_header
      _
    $region3: #{tpu_custom_call.1} parent=1 // loop_header
      %s25 = sphi 0, %s29
      %p26 = scmp.ge.s32.totalorder %s25, 4
      %s35 = sphi 0, %s37
      %s38 = sphi 0, %s35
      %s39 = sphi 0, %s38
      %s55 = sphi 0, %s39
      %s59 = sphi 0, %s59
      %s61 = sphi 0, %s59
      %s62 = sphi 0, %s61
      %s76 = sphi 0, %s62
      %s80 = sphi 0, %s80
      %s82 = sphi 0, %s80
      %s83 = sphi 0, %s82
      %s97 = sphi 0, %s83
      %s101 = sphi 0, %s101
      %s103 = sphi 0, %s101
      %s104 = sphi 0, %s103
      %s118 = sphi 0, %s104
      %s122 = sphi 0, %s122
      %s124 = sphi 0, %s122
      %s125 = sphi 0, %s124
      %s139 = sphi 0, %s125
      %s143 = sphi 0, %s143
      %s145 = sphi 0, %s143
      %s146 = sphi 0, %s145
      %s160 = sphi 0, %s146
      %s164 = sphi 0, %s164
      %s166 = sphi 0, %s164
      %s167 = sphi 0, %s166
      %s181 = sphi 0, %s167
      %s185 = sphi 0, %s185
      %s187 = sphi 0, %s185
      %s188 = sphi 0, %s187
      %s202 = sphi 0, %s188
      %s206 = sphi 0, %s206
      %s208 = sphi 0, %s206
      %s209 = sphi 0, %s208
      %s223 = sphi 0, %s209
      %s227 = sphi 0, %s227
      %s229 = sphi 0, %s227
      %s230 = sphi 0, %s229
      %s244 = sphi 0, %s230
      %s248 = sphi 0, %s248
      %s250 = sphi 0, %s248
      %s251 = sphi 0, %s250
      %s265 = sphi 0, %s251
      %s269 = sphi 0, %s269
      %s271 = sphi 0, %s269
      %s272 = sphi 0, %s271
      %s286 = sphi 0, %s272
      %s290 = sphi 0, %s290
      %s292 = sphi 0, %s290
      %s293 = sphi 0, %s292
      %s307 = sphi 0, %s293
      %s313 = sphi 0, %s315
      %s316 = sphi 0, %s313
      %s317 = sphi 0, %s316
      %s333 = sphi 0, %s317
    $region4: #{tpu_custom_call.1} parent=1 // loop_header_branch
      %28 = sbr.rel (%p26) target = $region8
    $region5: #{tpu_custom_call.1} parent=1 // loop_body
      %s30 = ssub.s32 %s25, 1
      %s31 = ssub.s32 %s25, 2
      %s32 = sadd.s32 %s25, 1
      %s33 = ssub.s32 %s25, %s32
      %p34 = scmp.eq.s32.totalorder %s33, 0
      %s36 = sadd.s32 %s35, 1
      %s37 = scalar_select %p34, %s35, %s36
      %p40 = pneg %p34
      %p41 = scmp.eq.s32.totalorder %s25, 1
      %p42 = por %p40, %p41
      %p43 = scmp.ne.s32.totalorder %s35, %s38
      %p44 = scmp.eq.s32.totalorder %s25, 0
      %p45 = por %p43, %p44
      %p46 = scmp.ne.s32.totalorder %s35, %s38
      %p47 = scmp.eq.s32.totalorder %s30, 1
      %p48 = por %p46, %p47
      %p49 = scmp.ne.s32.totalorder %s38, %s39
      %p50 = scmp.eq.s32.totalorder %s30, 0
      %p51 = por %p49, %p50
      %p52 = scmp.ne.s32.totalorder %s38, %s39
      %p53 = scmp.eq.s32.totalorder %s31, 1
      %p54 = por %p52, %p53
      %p56 = scmp.ne.s32.totalorder %s39, %s55
      %p57 = scmp.eq.s32.totalorder %s31, 0
      %p58 = por %p56, %p57
      %s60 = sadd.s32 %s59, 1
      %p63 = scmp.eq.s32.totalorder %s25, 1
      %p64 = scmp.ne.s32.totalorder %s59, %s61
      %p65 = scmp.eq.s32.totalorder %s25, 0
      %p66 = por %p64, %p65
      %p67 = scmp.ne.s32.totalorder %s59, %s61
      %p68 = scmp.eq.s32.totalorder %s30, 1
      %p69 = por %p67, %p68
      %p70 = scmp.ne.s32.totalorder %s61, %s62
      %p71 = scmp.eq.s32.totalorder %s30, 0
      %p72 = por %p70, %p71
      %p73 = scmp.ne.s32.totalorder %s61, %s62
      %p74 = scmp.eq.s32.totalorder %s31, 1
      %p75 = por %p73, %p74
      %p77 = scmp.ne.s32.totalorder %s62, %s76
      %p78 = scmp.eq.s32.totalorder %s31, 0
      %p79 = por %p77, %p78
      %s81 = sadd.s32 %s80, 1
      %p84 = scmp.eq.s32.totalorder %s25, 1
      %p85 = scmp.ne.s32.totalorder %s80, %s82
      %p86 = scmp.eq.s32.totalorder %s25, 0
      %p87 = por %p85, %p86
      %p88 = scmp.ne.s32.totalorder %s80, %s82
      %p89 = scmp.eq.s32.totalorder %s30, 1
      %p90 = por %p88, %p89
      %p91 = scmp.ne.s32.totalorder %s82, %s83
      %p92 = scmp.eq.s32.totalorder %s30, 0
      %p93 = por %p91, %p92
      %p94 = scmp.ne.s32.totalorder %s82, %s83
      %p95 = scmp.eq.s32.totalorder %s31, 1
      %p96 = por %p94, %p95
      %p98 = scmp.ne.s32.totalorder %s83, %s97
      %p99 = scmp.eq.s32.totalorder %s31, 0
      %p100 = por %p98, %p99
      %s102 = sadd.s32 %s101, 1
      %p105 = scmp.eq.s32.totalorder %s25, 1
      %p106 = scmp.ne.s32.totalorder %s101, %s103
      %p107 = scmp.eq.s32.totalorder %s25, 0
      %p108 = por %p106, %p107
      %p109 = scmp.ne.s32.totalorder %s101, %s103
      %p110 = scmp.eq.s32.totalorder %s30, 1
      %p111 = por %p109, %p110
      %p112 = scmp.ne.s32.totalorder %s103, %s104
      %p113 = scmp.eq.s32.totalorder %s30, 0
      %p114 = por %p112, %p113
      %p115 = scmp.ne.s32.totalorder %s103, %s104
      %p116 = scmp.eq.s32.totalorder %s31, 1
      %p117 = por %p115, %p116
      %p119 = scmp.ne.s32.totalorder %s104, %s118
      %p120 = scmp.eq.s32.totalorder %s31, 0
      %p121 = por %p119, %p120
      %s123 = sadd.s32 %s122, 1
      %p126 = scmp.eq.s32.totalorder %s25, 1
      %p127 = scmp.ne.s32.totalorder %s122, %s124
      %p128 = scmp.eq.s32.totalorder %s25, 0
      %p129 = por %p127, %p128
      %p130 = scmp.ne.s32.totalorder %s122, %s124
      %p131 = scmp.eq.s32.totalorder %s30, 1
      %p132 = por %p130, %p131
      %p133 = scmp.ne.s32.totalorder %s124, %s125
      %p134 = scmp.eq.s32.totalorder %s30, 0
      %p135 = por %p133, %p134
      %p136 = scmp.ne.s32.totalorder %s124, %s125
      %p137 = scmp.eq.s32.totalorder %s31, 1
      %p138 = por %p136, %p137
      %p140 = scmp.ne.s32.totalorder %s125, %s139
      %p141 = scmp.eq.s32.totalorder %s31, 0
      %p142 = por %p140, %p141
      %s144 = sadd.s32 %s143, 1
      %p147 = scmp.eq.s32.totalorder %s25, 1
      %p148 = scmp.ne.s32.totalorder %s143, %s145
      %p149 = scmp.eq.s32.totalorder %s25, 0
      %p150 = por %p148, %p149
      %p151 = scmp.ne.s32.totalorder %s143, %s145
      %p152 = scmp.eq.s32.totalorder %s30, 1
      %p153 = por %p151, %p152
      %p154 = scmp.ne.s32.totalorder %s145, %s146
      %p155 = scmp.eq.s32.totalorder %s30, 0
      %p156 = por %p154, %p155
      %p157 = scmp.ne.s32.totalorder %s145, %s146
      %p158 = scmp.eq.s32.totalorder %s31, 1
      %p159 = por %p157, %p158
      %p161 = scmp.ne.s32.totalorder %s146, %s160
      %p162 = scmp.eq.s32.totalorder %s31, 0
      %p163 = por %p161, %p162
      %s165 = sadd.s32 %s164, 1
      %p168 = scmp.eq.s32.totalorder %s25, 1
      %p169 = scmp.ne.s32.totalorder %s164, %s166
      %p170 = scmp.eq.s32.totalorder %s25, 0
      %p171 = por %p169, %p170
      %p172 = scmp.ne.s32.totalorder %s164, %s166
      %p173 = scmp.eq.s32.totalorder %s30, 1
      %p174 = por %p172, %p173
      %p175 = scmp.ne.s32.totalorder %s166, %s167
      %p176 = scmp.eq.s32.totalorder %s30, 0
      %p177 = por %p175, %p176
      %p178 = scmp.ne.s32.totalorder %s166, %s167
      %p179 = scmp.eq.s32.totalorder %s31, 1
      %p180 = por %p178, %p179
      %p182 = scmp.ne.s32.totalorder %s167, %s181
      %p183 = scmp.eq.s32.totalorder %s31, 0
      %p184 = por %p182, %p183
      %s186 = sadd.s32 %s185, 1
      %p189 = scmp.eq.s32.totalorder %s25, 1
      %p190 = scmp.ne.s32.totalorder %s185, %s187
      %p191 = scmp.eq.s32.totalorder %s25, 0
      %p192 = por %p190, %p191
      %p193 = scmp.ne.s32.totalorder %s185, %s187
      %p194 = scmp.eq.s32.totalorder %s30, 1
      %p195 = por %p193, %p194
      %p196 = scmp.ne.s32.totalorder %s187, %s188
      %p197 = scmp.eq.s32.totalorder %s30, 0
      %p198 = por %p196, %p197
      %p199 = scmp.ne.s32.totalorder %s187, %s188
      %p200 = scmp.eq.s32.totalorder %s31, 1
      %p201 = por %p199, %p200
      %p203 = scmp.ne.s32.totalorder %s188, %s202
      %p204 = scmp.eq.s32.totalorder %s31, 0
      %p205 = por %p203, %p204
      %s207 = sadd.s32 %s206, 1
      %p210 = scmp.eq.s32.totalorder %s25, 1
      %p211 = scmp.ne.s32.totalorder %s206, %s208
      %p212 = scmp.eq.s32.totalorder %s25, 0
      %p213 = por %p211, %p212
      %p214 = scmp.ne.s32.totalorder %s206, %s208
      %p215 = scmp.eq.s32.totalorder %s30, 1
      %p216 = por %p214, %p215
      %p217 = scmp.ne.s32.totalorder %s208, %s209
      %p218 = scmp.eq.s32.totalorder %s30, 0
      %p219 = por %p217, %p218
      %p220 = scmp.ne.s32.totalorder %s208, %s209
      %p221 = scmp.eq.s32.totalorder %s31, 1
      %p222 = por %p220, %p221
      %p224 = scmp.ne.s32.totalorder %s209, %s223
      %p225 = scmp.eq.s32.totalorder %s31, 0
      %p226 = por %p224, %p225
      %s228 = sadd.s32 %s227, 1
      %p231 = scmp.eq.s32.totalorder %s25, 1
      %p232 = scmp.ne.s32.totalorder %s227, %s229
      %p233 = scmp.eq.s32.totalorder %s25, 0
      %p234 = por %p232, %p233
      %p235 = scmp.ne.s32.totalorder %s227, %s229
      %p236 = scmp.eq.s32.totalorder %s30, 1
      %p237 = por %p235, %p236
      %p238 = scmp.ne.s32.totalorder %s229, %s230
      %p239 = scmp.eq.s32.totalorder %s30, 0
      %p240 = por %p238, %p239
      %p241 = scmp.ne.s32.totalorder %s229, %s230
      %p242 = scmp.eq.s32.totalorder %s31, 1
      %p243 = por %p241, %p242
      %p245 = scmp.ne.s32.totalorder %s230, %s244
      %p246 = scmp.eq.s32.totalorder %s31, 0
      %p247 = por %p245, %p246
      %s249 = sadd.s32 %s248, 1
      %p252 = scmp.eq.s32.totalorder %s25, 1
      %p253 = scmp.ne.s32.totalorder %s248, %s250
      %p254 = scmp.eq.s32.totalorder %s25, 0
      %p255 = por %p253, %p254
      %p256 = scmp.ne.s32.totalorder %s248, %s250
      %p257 = scmp.eq.s32.totalorder %s30, 1
      %p258 = por %p256, %p257
      %p259 = scmp.ne.s32.totalorder %s250, %s251
      %p260 = scmp.eq.s32.totalorder %s30, 0
      %p261 = por %p259, %p260
      %p262 = scmp.ne.s32.totalorder %s250, %s251
      %p263 = scmp.eq.s32.totalorder %s31, 1
      %p264 = por %p262, %p263
      %p266 = scmp.ne.s32.totalorder %s251, %s265
      %p267 = scmp.eq.s32.totalorder %s31, 0
      %p268 = por %p266, %p267
      %s270 = sadd.s32 %s269, 1
      %p273 = scmp.eq.s32.totalorder %s25, 1
      %p274 = scmp.ne.s32.totalorder %s269, %s271
      %p275 = scmp.eq.s32.totalorder %s25, 0
      %p276 = por %p274, %p275
      %p277 = scmp.ne.s32.totalorder %s269, %s271
      %p278 = scmp.eq.s32.totalorder %s30, 1
      %p279 = por %p277, %p278
      %p280 = scmp.ne.s32.totalorder %s271, %s272
      %p281 = scmp.eq.s32.totalorder %s30, 0
      %p282 = por %p280, %p281
      %p283 = scmp.ne.s32.totalorder %s271, %s272
      %p284 = scmp.eq.s32.totalorder %s31, 1
      %p285 = por %p283, %p284
      %p287 = scmp.ne.s32.totalorder %s272, %s286
      %p288 = scmp.eq.s32.totalorder %s31, 0
      %p289 = por %p287, %p288
      %s291 = sadd.s32 %s290, 1
      %p294 = scmp.eq.s32.totalorder %s25, 1
      %p295 = scmp.ne.s32.totalorder %s290, %s292
      %p296 = scmp.eq.s32.totalorder %s25, 0
      %p297 = por %p295, %p296
      %p298 = scmp.ne.s32.totalorder %s290, %s292
      %p299 = scmp.eq.s32.totalorder %s30, 1
      %p300 = por %p298, %p299
      %p301 = scmp.ne.s32.totalorder %s292, %s293
      %p302 = scmp.eq.s32.totalorder %s30, 0
      %p303 = por %p301, %p302
      %p304 = scmp.ne.s32.totalorder %s292, %s293
      %p305 = scmp.eq.s32.totalorder %s31, 1
      %p306 = por %p304, %p305
      %p308 = scmp.ne.s32.totalorder %s293, %s307
      %p309 = scmp.eq.s32.totalorder %s31, 0
      %p310 = por %p308, %p309
      %s311 = ssub.s32 %s25, %s32
      %p312 = scmp.eq.s32.totalorder %s311, 0
      %s314 = sadd.s32 %s313, 1
      %s315 = scalar_select %p312, %s313, %s314
      %p318 = pneg %p312
      %p319 = scmp.eq.s32.totalorder %s25, 1
      %p320 = por %p318, %p319
      %p321 = scmp.ne.s32.totalorder %s313, %s316
      %p322 = scmp.eq.s32.totalorder %s25, 0
      %p323 = por %p321, %p322
      %p324 = scmp.ne.s32.totalorder %s313, %s316
      %p325 = scmp.eq.s32.totalorder %s30, 1
      %p326 = por %p324, %p325
      %p327 = scmp.ne.s32.totalorder %s316, %s317
      %p328 = scmp.eq.s32.totalorder %s30, 0
      %p329 = por %p327, %p328
      %p330 = scmp.ne.s32.totalorder %s316, %s317
      %p331 = scmp.eq.s32.totalorder %s31, 1
      %p332 = por %p330, %p331
      %p334 = scmp.ne.s32.totalorder %s317, %s333
      %p335 = scmp.eq.s32.totalorder %s31, 0
      %p336 = por %p334, %p335
      %p337 = scmp.le.s32.totalorder 1, %s25
      %p338 = scmp.lt.s32.totalorder %s25, 3
      %p339 = pnand %p337, %p338
      %p340 = pneg %p339
      // Predicated region
      $region9: #{tpu_custom_call.1} parent=5 // pred_check
        _
      $region10: #{tpu_custom_call.1} parent=5 // pred_check_branch
        %342 = sbr.rel (%p339) target = $region12
      $region11: #{tpu_custom_call.1} parent=5 // pred_region
        %s343 = ssub.s32 %s25, 1
        // Predicated region
        $region13: #{tpu_custom_call.1} parent=11 // pred_check
          %p344 = pneg %p72
        $region14: #{tpu_custom_call.1} parent=11 // pred_check_branch
          %346 = sbr.rel (%p344) target = $region16
        $region15: #{tpu_custom_call.1} parent=11 // pred_region
          _
        $region16: #{tpu_custom_call.1} parent=11 // pred_fallthru
          _
        // Predicated region
        $region17: #{tpu_custom_call.1} parent=11 // pred_check
          %p347 = pneg %p93
        $region18: #{tpu_custom_call.1} parent=11 // pred_check_branch
          %349 = sbr.rel (%p347) target = $region20
        $region19: #{tpu_custom_call.1} parent=11 // pred_region
          _
        $region20: #{tpu_custom_call.1} parent=11 // pred_fallthru
          _
        // Predicated region
        $region21: #{tpu_custom_call.1} parent=11 // pred_check
          %p350 = pneg %p114
        $region22: #{tpu_custom_call.1} parent=11 // pred_check_branch
          %352 = sbr.rel (%p350) target = $region24
        $region23: #{tpu_custom_call.1} parent=11 // pred_region
          _
        $region24: #{tpu_custom_call.1} parent=11 // pred_fallthru
          _
        // Predicated region
        $region25: #{tpu_custom_call.1} parent=11 // pred_check
          %p353 = pneg %p135
        $region26: #{tpu_custom_call.1} parent=11 // pred_check_branch
          %355 = sbr.rel (%p353) target = $region28
        $region27: #{tpu_custom_call.1} parent=11 // pred_region
          _
        $region28: #{tpu_custom_call.1} parent=11 // pred_fallthru
          _
        // Predicated region
        $region29: #{tpu_custom_call.1} parent=11 // pred_check
          %p356 = pneg %p156
        $region30: #{tpu_custom_call.1} parent=11 // pred_check_branch
          %358 = sbr.rel (%p356) target = $region32
        $region31: #{tpu_custom_call.1} parent=11 // pred_region
          _
        $region32: #{tpu_custom_call.1} parent=11 // pred_fallthru
          _
        // Predicated region
        $region33: #{tpu_custom_call.1} parent=11 // pred_check
          %p359 = pneg %p177
        $region34: #{tpu_custom_call.1} parent=11 // pred_check_branch
          %361 = sbr.rel (%p359) target = $region36
        $region35: #{tpu_custom_call.1} parent=11 // pred_region
          _
        $region36: #{tpu_custom_call.1} parent=11 // pred_fallthru
          _
        // Predicated region
        $region37: #{tpu_custom_call.1} parent=11 // pred_check
          %p362 = pneg %p198
        $region38: #{tpu_custom_call.1} parent=11 // pred_check_branch
          %364 = sbr.rel (%p362) target = $region40
        $region39: #{tpu_custom_call.1} parent=11 // pred_region
          _
        $region40: #{tpu_custom_call.1} parent=11 // pred_fallthru
          _
        // Predicated region
        $region41: #{tpu_custom_call.1} parent=11 // pred_check
          %p365 = pneg %p219
        $region42: #{tpu_custom_call.1} parent=11 // pred_check_branch
          %367 = sbr.rel (%p365) target = $region44
        $region43: #{tpu_custom_call.1} parent=11 // pred_region
          _
        $region44: #{tpu_custom_call.1} parent=11 // pred_fallthru
          _
        // Predicated region
        $region45: #{tpu_custom_call.1} parent=11 // pred_check
          %p368 = pneg %p240
        $region46: #{tpu_custom_call.1} parent=11 // pred_check_branch
          %370 = sbr.rel (%p368) target = $region48
        $region47: #{tpu_custom_call.1} parent=11 // pred_region
          _
        $region48: #{tpu_custom_call.1} parent=11 // pred_fallthru
          _
        // Predicated region
        $region49: #{tpu_custom_call.1} parent=11 // pred_check
          %p371 = pneg %p261
        $region50: #{tpu_custom_call.1} parent=11 // pred_check_branch
          %373 = sbr.rel (%p371) target = $region52
        $region51: #{tpu_custom_call.1} parent=11 // pred_region
          _
        $region52: #{tpu_custom_call.1} parent=11 // pred_fallthru
          _
        // Predicated region
        $region53: #{tpu_custom_call.1} parent=11 // pred_check
          %p374 = pneg %p282
        $region54: #{tpu_custom_call.1} parent=11 // pred_check_branch
          %376 = sbr.rel (%p374) target = $region56
        $region55: #{tpu_custom_call.1} parent=11 // pred_region
          _
        $region56: #{tpu_custom_call.1} parent=11 // pred_fallthru
          _
        // Predicated region
        $region57: #{tpu_custom_call.1} parent=11 // pred_check
          %p377 = pneg %p303
        $region58: #{tpu_custom_call.1} parent=11 // pred_check_branch
          %379 = sbr.rel (%p377) target = $region60
        $region59: #{tpu_custom_call.1} parent=11 // pred_region
          _
        $region60: #{tpu_custom_call.1} parent=11 // pred_fallthru
          _
      $region12: #{tpu_custom_call.1} parent=5 // pred_fallthru
        _
      %p380 = scmp.lt.s32.totalorder %s25, 2
      // Predicated region
      $region61: #{tpu_custom_call.1} parent=5 // pred_check
        %p381 = pneg %p380
      $region62: #{tpu_custom_call.1} parent=5 // pred_check_branch
        %383 = sbr.rel (%p381) target = $region64
      $region63: #{tpu_custom_call.1} parent=5 // pred_region
        // Predicated region
        $region65: #{tpu_custom_call.1} parent=63 // pred_check
          %p384 = pneg %p45
        $region66: #{tpu_custom_call.1} parent=63 // pred_check_branch
          %386 = sbr.rel (%p384) target = $region68
        $region67: #{tpu_custom_call.1} parent=63 // pred_region
          %s387 = sand.u32 %s35, 1
          %s388 = scalar_lea.sflag [#allocation3], %s387
          %s389 = sand.u32 %s35, 1
          %s390 = smul.addr %s389, 8
          %s391 = scalar_lea.vmem [#allocation2], %s390
          %s393 = ssub.s32 128, 128
          %394 = vsyncadd %s388, %s393
          %s395 = smul.addr %s25, 128
          %s396 = scalar_lea.hbm %s0, %s395
          %s398 = sshll.u32 %s391, 4
          %s399 = int_to_ptr.vmem [resolvable:$true] %s398
          %401 = dma.hbm_to_vmem [thread:$0]  %s396, 128, %s399, %s388
        $region68: #{tpu_custom_call.1} parent=63 // pred_fallthru
          _
      $region64: #{tpu_custom_call.1} parent=5 // pred_fallthru
        _
      %p402 = scmp.le.s32.totalorder 1, %s25
      %p403 = scmp.lt.s32.totalorder %s25, 3
      %p404 = pnand %p402, %p403
      %p405 = pneg %p404
      // Predicated region
      $region69: #{tpu_custom_call.1} parent=5 // pred_check
        _
      $region70: #{tpu_custom_call.1} parent=5 // pred_check_branch
        %407 = sbr.rel (%p404) target = $region72
      $region71: #{tpu_custom_call.1} parent=5 // pred_region
        %s408 = ssub.s32 %s25, 1
        %s409 = sand.u32 %s38, 1
        %s410 = scalar_lea.sflag [#allocation3], %s409
        %s411 = sand.u32 %s38, 1
        %s412 = smul.addr %s411, 8
        %s413 = scalar_lea.vmem [#allocation2], %s412
        // Predicated region
        $region73: #{tpu_custom_call.1} parent=71 // pred_check
          %p414 = pneg %p51
        $region74: #{tpu_custom_call.1} parent=71 // pred_check_branch
          %416 = sbr.rel (%p414) target = $region76
        $region75: #{tpu_custom_call.1} parent=71 // pred_region
          %417 = dma.done %s410, 128
        $region76: #{tpu_custom_call.1} parent=71 // pred_fallthru
          _
        %s418 = sand.u32 %s38, 1
        %s419 = scalar_lea.sflag [#allocation3], %s418
        %s420 = sand.u32 %s38, 1
        %s421 = smul.addr %s420, 8
        %s422 = scalar_lea.vmem [#allocation2], %s421
        %p423 = pneg %p51
        %p424 = pneg %p48
        %p425 = pneg %p72
        %p426 = pneg %p69
        %p427 = pneg %p93
        %p428 = pneg %p90
        %p429 = pneg %p114
        %p430 = pneg %p111
        %p431 = pneg %p135
        %p432 = pneg %p132
        %p433 = pneg %p156
        %p434 = pneg %p153
        %p435 = pneg %p177
        %p436 = pneg %p174
        %p437 = pneg %p198
        %p438 = pneg %p195
        %p439 = pneg %p219
        %p440 = pneg %p216
        %p441 = pneg %p240
        %p442 = pneg %p237
        %p443 = pneg %p261
        %p444 = pneg %p258
        %p445 = pneg %p282
        %p446 = pneg %p279
        %p447 = pneg %p303
        %p448 = pneg %p300
        %p449 = pneg %p329
        %p450 = pneg %p326
        %s451 = sand.u32 %s316, 1
        %s452 = scalar_lea.sflag [#allocation4], %s451
        %s453 = sand.u32 %s316, 1
        %s454 = smul.addr %s453, 8
        %s455 = scalar_lea.vmem [#allocation5], %s454
        %v456 = vld [vmem:[%s413] sm:$0xff]
        %v457 = vld [vmem:[%s1] sm:$0x1]
        %v458 = vld [vmem:[%s2] sm:$0x1]
        %vm459 = vcmask 261120
        %v460 = vsel %vm459, %v456, 0.0
        %461 = vadd.xlane.f32.xlu0 %v460
        %v462 = vpop.xlane.xlu0 %461
        %v463 = vrcp.pop 32.0
        %v464 = vmul.f32 %v462, %v463
        %v465 = vsub.f32 %v456, %v464
        %v466 = vmul.f32 %v465, %v465
        %v467 = vsel %vm459, %v466, 0.0
        %468 = vadd.xlane.f32.xlu0 %v467
        %v469 = vpop.xlane.xlu0 %468
        %v470 = vmul.f32 %v469, %v463
        %v471 = vadd.f32 %v470, 1e-05
        %v472 = vrsqrt.pop %v471
        %v473 = vmul.f32 %v465, %v472
        %v475 = vlaneseq
        %v476 = vshrl.u32 %v475, 7
        %v477 = vsub.s32 0, %v476
        %v478 = vrot.slane %v457, %v477
        %v480 = vmul.f32 %v473, %v478
        %v482 = vlaneseq
        %v483 = vshrl.u32 %v482, 7
        %v484 = vsub.s32 0, %v483
        %v485 = vrot.slane %v458, %v484
        %v487 = vadd.f32 %v480, %v485
        %v488 = vld [vmem:[%s3] sm:$0xff]
        %v489 = vld [vmem:[%s3 + $0x8] sm:$0xff]
        %v490 = vld [vmem:[%s3 + $0x10] sm:$0xff]
        %v491 = vld [vmem:[%s3 + $0x18] sm:$0xff]
        %v492 = vld [vmem:[%s4] sm:$0x1]
        %v494 = vlaneseq
        %v495 = vshrl.u32 %v494, 7
        %v496 = vsub.s32 0, %v495
        %v497 = vrot.slane %v492, %v496
        %v500 = vsel %vm459, %v487, 0
        %502 = vmatprep.subr.mxu0 0.0
        %503 = vmatpush1.msra.mxu0 %v488
        %504 = vmatprep.subr.mxu0 0.0
        %505 = vmatpush1.msra.mxu0 %v489
        %506 = vmatprep.subr.mxu0 0.0
        %507 = vmatpush1.msra.mxu0 %v490
        %508 = vmatprep.subr.mxu0 0.0
        %509 = vmatpush1.msra.mxu0 %v491
        %510 = vmatprep.subr.mxu0 0.0
        %511 = vmatpush1.msra.mxu0 0.0
        %512 = vmatprep.subr.mxu0 0.0
        %513 = vmatpush1.msra.mxu0 0.0
        %514 = vmatprep.subr.mxu0 0.0
        %515 = vmatpush1.msra.mxu0 0.0
        %516 = vmatprep.subr.mxu0 0.0
        %517 = vmatpush1.msra.mxu0 0.0
        %518 = vmatprep.subr.mxu0 0.0
        %519 = vmatpush1.msra.mxu0 0.0
        %520 = vmatprep.subr.mxu0 0.0
        %521 = vmatpush1.msra.mxu0 0.0
        %522 = vmatprep.subr.mxu0 0.0
        %523 = vmatpush1.msra.mxu0 0.0
        %524 = vmatprep.subr.mxu0 0.0
        %525 = vmatpush1.msra.mxu0 0.0
        %526 = vmatprep.subr.mxu0 0.0
        %527 = vmatpush1.msra.mxu0 0.0
        %528 = vmatprep.subr.mxu0 0.0
        %529 = vmatpush1.msra.mxu0 0.0
        %530 = vmatprep.subr.mxu0 0.0
        %531 = vmatpush1.msra.mxu0 0.0
        %532 = vmatprep.subr.mxu0 0.0
        %533 = vmatpush1.msra.mxu0 0.0
        %534 = vmatprep.subr.mxu0 0.0
        %535 = vmatpush1.msra.mxu0 0.0
        %536 = vmatprep.subr.mxu0 0.0
        %537 = vmatpush1.msra.mxu0 0.0
        %538 = vmatprep.subr.mxu0 0.0
        %539 = vmatpush1.msra.mxu0 0.0
        %540 = vmatprep.subr.mxu0 0.0
        %541 = vmatpush1.msra.mxu0 0.0
        %542 = vmatprep.subr.mxu0 0.0
        %543 = vmatpush1.msra.mxu0 0.0
        %544 = vmatprep.subr.mxu0 0.0
        %545 = vmatpush1.msra.mxu0 0.0
        %546 = vmatprep.subr.mxu0 0.0
        %547 = vmatpush1.msra.mxu0 0.0
        %548 = vmatprep.subr.mxu0 0.0
        %549 = vmatpush1.msra.mxu0 0.0
        %550 = vmatprep.subr.mxu0 0.0
        %551 = vmatpush1.msra.mxu0 0.0
        %552 = vmatprep.subr.mxu0 0.0
        %553 = vmatpush1.msra.mxu0 0.0
        %554 = vmatprep.subr.mxu0 0.0
        %555 = vmatpush1.msra.mxu0 0.0
        %556 = vmatprep.subr.mxu0 0.0
        %557 = vmatpush1.msra.mxu0 0.0
        %558 = vmatprep.subr.mxu0 0.0
        %559 = vmatpush1.msra.mxu0 0.0
        %560 = vmatprep.subr.mxu0 0.0
        %561 = vmatpush1.msra.mxu0 0.0
        %562 = vmatprep.subr.mxu0 0.0
        %563 = vmatpush1.msra.mxu0 0.0
        %564 = vmatprep.subr.mxu0 0.0
        %565 = vmatpush1.msra.mxu0 0.0
        %566 = vmatprep.mubr.f32.mxu0 0.0
        %567 = vmatmul.mubr.f32.gmra.mrb[0].mxu0 %v500
        %v568 = vpop.f32.mrb[0].mxu0
        %v569 = vadd.f32 %v497, %v568
        %v570 = vpop.f32.mrb[0].mxu0
        %571 = vdwg.mxu0
        %573 = vrot.lane.b32.xlu0 %v569, 96
        %v574 = vpop.permute.xlu0 %573
        %vm575 = vcmask 64512
        %v576 = vsel %vm575, %v569, 0
        %v578 = vsel %vm575, %v574, 0
        %580 = vmatprep.subr.mxu0 0.0
        %581 = vmatpush1.xpose.msra.mxu0 %v578
        %582 = vmatprep.subr.mxu0 0.0
        %583 = vmatpush1.xpose.msra.mxu0 0.0
        %584 = vmatprep.subr.mxu0 0.0
        %585 = vmatpush1.xpose.msra.mxu0 0.0
        %586 = vmatprep.subr.mxu0 0.0
        %587 = vmatpush1.xpose.msra.mxu0 0.0
        %588 = vmatprep.subr.mxu0 0.0
        %589 = vmatpush1.xpose.msra.mxu0 0.0
        %590 = vmatprep.subr.mxu0 0.0
        %591 = vmatpush1.xpose.msra.mxu0 0.0
        %592 = vmatprep.subr.mxu0 0.0
        %593 = vmatpush1.xpose.msra.mxu0 0.0
        %594 = vmatprep.subr.mxu0 0.0
        %595 = vmatpush1.xpose.msra.mxu0 0.0
        %596 = vmatprep.subr.mxu0 0.0
        %597 = vmatpush1.xpose.msra.mxu0 0.0
        %598 = vmatprep.subr.mxu0 0.0
        %599 = vmatpush1.xpose.msra.mxu0 0.0
        %600 = vmatprep.subr.mxu0 0.0
        %601 = vmatpush1.xpose.msra.mxu0 0.0
        %602 = vmatprep.subr.mxu0 0.0
        %603 = vmatpush1.xpose.msra.mxu0 0.0
        %604 = vmatprep.subr.mxu0 0.0
        %605 = vmatpush1.xpose.msra.mxu0 0.0
        %606 = vmatprep.subr.mxu0 0.0
        %607 = vmatpush1.xpose.msra.mxu0 0.0
        %608 = vmatprep.subr.mxu0 0.0
        %609 = vmatpush1.xpose.msra.mxu0 0.0
        %610 = vmatprep.subr.mxu0 0.0
        %611 = vmatpush1.xpose.msra.mxu0 0.0
        %612 = vmatprep.subr.mxu0 0.0
        %613 = vmatpush1.xpose.msra.mxu0 0.0
        %614 = vmatprep.subr.mxu0 0.0
        %615 = vmatpush1.xpose.msra.mxu0 0.0
        %616 = vmatprep.subr.mxu0 0.0
        %617 = vmatpush1.xpose.msra.mxu0 0.0
        %618 = vmatprep.subr.mxu0 0.0
        %619 = vmatpush1.xpose.msra.mxu0 0.0
        %620 = vmatprep.subr.mxu0 0.0
        %621 = vmatpush1.xpose.msra.mxu0 0.0
        %622 = vmatprep.subr.mxu0 0.0
        %623 = vmatpush1.xpose.msra.mxu0 0.0
        %624 = vmatprep.subr.mxu0 0.0
        %625 = vmatpush1.xpose.msra.mxu0 0.0
        %626 = vmatprep.subr.mxu0 0.0
        %627 = vmatpush1.xpose.msra.mxu0 0.0
        %628 = vmatprep.subr.mxu0 0.0
        %629 = vmatpush1.xpose.msra.mxu0 0.0
        %630 = vmatprep.subr.mxu0 0.0
        %631 = vmatpush1.xpose.msra.mxu0 0.0
        %632 = vmatprep.subr.mxu0 0.0
        %633 = vmatpush1.xpose.msra.mxu0 0.0
        %634 = vmatprep.subr.mxu0 0.0
        %635 = vmatpush1.xpose.msra.mxu0 0.0
        %636 = vmatprep.subr.mxu0 0.0
        %637 = vmatpush1.xpose.msra.mxu0 0.0
        %638 = vmatprep.subr.mxu0 0.0
        %639 = vmatpush1.xpose.msra.mxu0 0.0
        %640 = vmatprep.subr.mxu0 0.0
        %641 = vmatpush1.xpose.msra.mxu0 0.0
        %642 = vmatprep.subr.mxu0 0.0
        %643 = vmatpush1.xpose.msra.mxu0 0.0
        %644 = vmatprep.mubr.f32.mxu0 0.0
        %645 = vmatmul.mubr.f32.gmra.mrb[0].mxu0 %v576
        %v646 = vpop.f32.mrb[0].mxu0
        %v647 = vadd.f32 0.0, %v646
        %v648 = vpop.f32.mrb[0].mxu0
        %649 = vdwg.mxu0
        %v650 = vsel %vm575, %v647, -inf
        %651 = vmax.xlane.f32.xlu0 %v650
        %v652 = vpop.xlane.xlu0 %651
        %v653 = vsub.f32 %v647, %v652
        %v654 = vmul.f32 %v653, 1.442695
        %v655 = vpow.pop %v654
        %v656 = vsel %vm575, %v655, 0.0
        %657 = vadd.xlane.f32.xlu0 %v656
        %v658 = vpop.xlane.xlu0 %657
        %659 = vrot.lane.b32.xlu0 %v569, 64
        %v660 = vpop.permute.xlu0 %659
        %v663 = vsel %vm575, %v655, 0
        %665 = vmatprep.subr.mxu0 0.0
        %666 = vmatpush1.msra.mxu0 %v660
        %667 = vmatprep.subr.mxu0 0.0
        %668 = vmatpush1.msra.mxu0 0.0
        %669 = vmatprep.subr.mxu0 0.0
        %670 = vmatpush1.msra.mxu0 0.0
        %671 = vmatprep.subr.mxu0 0.0
        %672 = vmatpush1.msra.mxu0 0.0
        %673 = vmatprep.subr.mxu0 0.0
        %674 = vmatpush1.msra.mxu0 0.0
        %675 = vmatprep.subr.mxu0 0.0
        %676 = vmatpush1.msra.mxu0 0.0
        %677 = vmatprep.subr.mxu0 0.0
        %678 = vmatpush1.msra.mxu0 0.0
        %679 = vmatprep.subr.mxu0 0.0
        %680 = vmatpush1.msra.mxu0 0.0
        %681 = vmatprep.subr.mxu0 0.0
        %682 = vmatpush1.msra.mxu0 0.0
        %683 = vmatprep.subr.mxu0 0.0
        %684 = vmatpush1.msra.mxu0 0.0
        %685 = vmatprep.subr.mxu0 0.0
        %686 = vmatpush1.msra.mxu0 0.0
        %687 = vmatprep.subr.mxu0 0.0
        %688 = vmatpush1.msra.mxu0 0.0
        %689 = vmatprep.subr.mxu0 0.0
        %690 = vmatpush1.msra.mxu0 0.0
        %691 = vmatprep.subr.mxu0 0.0
        %692 = vmatpush1.msra.mxu0 0.0
        %693 = vmatprep.subr.mxu0 0.0
        %694 = vmatpush1.msra.mxu0 0.0
        %695 = vmatprep.subr.mxu0 0.0
        %696 = vmatpush1.msra.mxu0 0.0
        %697 = vmatprep.subr.mxu0 0.0
        %698 = vmatpush1.msra.mxu0 0.0
        %699 = vmatprep.subr.mxu0 0.0
        %700 = vmatpush1.msra.mxu0 0.0
        %701 = vmatprep.subr.mxu0 0.0
        %702 = vmatpush1.msra.mxu0 0.0
        %703 = vmatprep.subr.mxu0 0.0
        %704 = vmatpush1.msra.mxu0 0.0
        %705 = vmatprep.subr.mxu0 0.0
        %706 = vmatpush1.msra.mxu0 0.0
        %707 = vmatprep.subr.mxu0 0.0
        %708 = vmatpush1.msra.mxu0 0.0
        %709 = vmatprep.subr.mxu0 0.0
        %710 = vmatpush1.msra.mxu0 0.0
        %711 = vmatprep.subr.mxu0 0.0
        %712 = vmatpush1.msra.mxu0 0.0
        %713 = vmatprep.subr.mxu0 0.0
        %714 = vmatpush1.msra.mxu0 0.0
        %715 = vmatprep.subr.mxu0 0.0
        %716 = vmatpush1.msra.mxu0 0.0
        %717 = vmatprep.subr.mxu0 0.0
        %718 = vmatpush1.msra.mxu0 0.0
        %719 = vmatprep.subr.mxu0 0.0
        %720 = vmatpush1.msra.mxu0 0.0
        %721 = vmatprep.subr.mxu0 0.0
        %722 = vmatpush1.msra.mxu0 0.0
        %723 = vmatprep.subr.mxu0 0.0
        %724 = vmatpush1.msra.mxu0 0.0
        %725 = vmatprep.subr.mxu0 0.0
        %726 = vmatpush1.msra.mxu0 0.0
        %727 = vmatprep.subr.mxu0 0.0
        %728 = vmatpush1.msra.mxu0 0.0
        %729 = vmatprep.mubr.f32.mxu0 0.0
        %730 = vmatmul.mubr.f32.gmra.mrb[0].mxu0 %v663
        %v731 = vpop.f32.mrb[0].mxu0
        %v732 = vadd.f32 0.0, %v731
        %v733 = vpop.f32.mrb[0].mxu0
        %734 = vdwg.mxu0
        %v735 = vrcp.pop %v658
        %v736 = vmul.f32 %v732, %v735
        %737 = vrot.lane.b32.xlu0 %v569, 120
        %v738 = vpop.permute.xlu0 %737
        %739 = vrot.lane.b32.xlu0 %v569, 88
        %v740 = vpop.permute.xlu0 %739
        %v741 = vsel %vm575, %v738, 0
        %v743 = vsel %vm575, %v740, 0
        %745 = vmatprep.subr.mxu0 0.0
        %746 = vmatpush1.xpose.msra.mxu0 %v743
        %747 = vmatprep.subr.mxu0 0.0
        %748 = vmatpush1.xpose.msra.mxu0 0.0
        %749 = vmatprep.subr.mxu0 0.0
        %750 = vmatpush1.xpose.msra.mxu0 0.0
        %751 = vmatprep.subr.mxu0 0.0
        %752 = vmatpush1.xpose.msra.mxu0 0.0
        %753 = vmatprep.subr.mxu0 0.0
        %754 = vmatpush1.xpose.msra.mxu0 0.0
        %755 = vmatprep.subr.mxu0 0.0
        %756 = vmatpush1.xpose.msra.mxu0 0.0
        %757 = vmatprep.subr.mxu0 0.0
        %758 = vmatpush1.xpose.msra.mxu0 0.0
        %759 = vmatprep.subr.mxu0 0.0
        %760 = vmatpush1.xpose.msra.mxu0 0.0
        %761 = vmatprep.subr.mxu0 0.0
        %762 = vmatpush1.xpose.msra.mxu0 0.0
        %763 = vmatprep.subr.mxu0 0.0
        %764 = vmatpush1.xpose.msra.mxu0 0.0
        %765 = vmatprep.subr.mxu0 0.0
        %766 = vmatpush1.xpose.msra.mxu0 0.0
        %767 = vmatprep.subr.mxu0 0.0
        %768 = vmatpush1.xpose.msra.mxu0 0.0
        %769 = vmatprep.subr.mxu0 0.0
        %770 = vmatpush1.xpose.msra.mxu0 0.0
        %771 = vmatprep.subr.mxu0 0.0
        %772 = vmatpush1.xpose.msra.mxu0 0.0
        %773 = vmatprep.subr.mxu0 0.0
        %774 = vmatpush1.xpose.msra.mxu0 0.0
        %775 = vmatprep.subr.mxu0 0.0
        %776 = vmatpush1.xpose.msra.mxu0 0.0
        %777 = vmatprep.subr.mxu0 0.0
        %778 = vmatpush1.xpose.msra.mxu0 0.0
        %779 = vmatprep.subr.mxu0 0.0
        %780 = vmatpush1.xpose.msra.mxu0 0.0
        %781 = vmatprep.subr.mxu0 0.0
        %782 = vmatpush1.xpose.msra.mxu0 0.0
        %783 = vmatprep.subr.mxu0 0.0
        %784 = vmatpush1.xpose.msra.mxu0 0.0
        %785 = vmatprep.subr.mxu0 0.0
        %786 = vmatpush1.xpose.msra.mxu0 0.0
        %787 = vmatprep.subr.mxu0 0.0
        %788 = vmatpush1.xpose.msra.mxu0 0.0
        %789 = vmatprep.subr.mxu0 0.0
        %790 = vmatpush1.xpose.msra.mxu0 0.0
        %791 = vmatprep.subr.mxu0 0.0
        %792 = vmatpush1.xpose.msra.mxu0 0.0
        %793 = vmatprep.subr.mxu0 0.0
        %794 = vmatpush1.xpose.msra.mxu0 0.0
        %795 = vmatprep.subr.mxu0 0.0
        %796 = vmatpush1.xpose.msra.mxu0 0.0
        %797 = vmatprep.subr.mxu0 0.0
        %798 = vmatpush1.xpose.msra.mxu0 0.0
        %799 = vmatprep.subr.mxu0 0.0
        %800 = vmatpush1.xpose.msra.mxu0 0.0
        %801 = vmatprep.subr.mxu0 0.0
        %802 = vmatpush1.xpose.msra.mxu0 0.0
        %803 = vmatprep.subr.mxu0 0.0
        %804 = vmatpush1.xpose.msra.mxu0 0.0
        %805 = vmatprep.subr.mxu0 0.0
        %806 = vmatpush1.xpose.msra.mxu0 0.0
        %807 = vmatprep.subr.mxu0 0.0
        %808 = vmatpush1.xpose.msra.mxu0 0.0
        %809 = vmatprep.mubr.f32.mxu0 0.0
        %810 = vmatmul.mubr.f32.gmra.mrb[0].mxu0 %v741
        %v811 = vpop.f32.mrb[0].mxu0
        %v812 = vadd.f32 0.0, %v811
        %v813 = vpop.f32.mrb[0].mxu0
        %814 = vdwg.mxu0
        %v815 = vsel %vm575, %v812, -inf
        %816 = vmax.xlane.f32.xlu0 %v815
        %v817 = vpop.xlane.xlu0 %816
        %v818 = vsub.f32 %v812, %v817
        %v819 = vmul.f32 %v818, 1.442695
        %v820 = vpow.pop %v819
        %v821 = vsel %vm575, %v820, 0.0
        %822 = vadd.xlane.f32.xlu0 %v821
        %v823 = vpop.xlane.xlu0 %822
        %824 = vrot.lane.b32.xlu0 %v569, 56
        %v825 = vpop.permute.xlu0 %824
        %v828 = vsel %vm575, %v820, 0
        %830 = vmatprep.subr.mxu0 0.0
        %831 = vmatpush1.msra.mxu0 %v825
        %832 = vmatprep.subr.mxu0 0.0
        %833 = vmatpush1.msra.mxu0 0.0
        %834 = vmatprep.subr.mxu0 0.0
        %835 = vmatpush1.msra.mxu0 0.0
        %836 = vmatprep.subr.mxu0 0.0
        %837 = vmatpush1.msra.mxu0 0.0
        %838 = vmatprep.subr.mxu0 0.0
        %839 = vmatpush1.msra.mxu0 0.0
        %840 = vmatprep.subr.mxu0 0.0
        %841 = vmatpush1.msra.mxu0 0.0
        %842 = vmatprep.subr.mxu0 0.0
        %843 = vmatpush1.msra.mxu0 0.0
        %844 = vmatprep.subr.mxu0 0.0
        %845 = vmatpush1.msra.mxu0 0.0
        %846 = vmatprep.subr.mxu0 0.0
        %847 = vmatpush1.msra.mxu0 0.0
        %848 = vmatprep.subr.mxu0 0.0
        %849 = vmatpush1.msra.mxu0 0.0
        %850 = vmatprep.subr.mxu0 0.0
        %851 = vmatpush1.msra.mxu0 0.0
        %852 = vmatprep.subr.mxu0 0.0
        %853 = vmatpush1.msra.mxu0 0.0
        %854 = vmatprep.subr.mxu0 0.0
        %855 = vmatpush1.msra.mxu0 0.0
        %856 = vmatprep.subr.mxu0 0.0
        %857 = vmatpush1.msra.mxu0 0.0
        %858 = vmatprep.subr.mxu0 0.0
        %859 = vmatpush1.msra.mxu0 0.0
        %860 = vmatprep.subr.mxu0 0.0
        %861 = vmatpush1.msra.mxu0 0.0
        %862 = vmatprep.subr.mxu0 0.0
        %863 = vmatpush1.msra.mxu0 0.0
        %864 = vmatprep.subr.mxu0 0.0
        %865 = vmatpush1.msra.mxu0 0.0
        %866 = vmatprep.subr.mxu0 0.0
        %867 = vmatpush1.msra.mxu0 0.0
        %868 = vmatprep.subr.mxu0 0.0
        %869 = vmatpush1.msra.mxu0 0.0
        %870 = vmatprep.subr.mxu0 0.0
        %871 = vmatpush1.msra.mxu0 0.0
        %872 = vmatprep.subr.mxu0 0.0
        %873 = vmatpush1.msra.mxu0 0.0
        %874 = vmatprep.subr.mxu0 0.0
        %875 = vmatpush1.msra.mxu0 0.0
        %876 = vmatprep.subr.mxu0 0.0
        %877 = vmatpush1.msra.mxu0 0.0
        %878 = vmatprep.subr.mxu0 0.0
        %879 = vmatpush1.msra.mxu0 0.0
        %880 = vmatprep.subr.mxu0 0.0
        %881 = vmatpush1.msra.mxu0 0.0
        %882 = vmatprep.subr.mxu0 0.0
        %883 = vmatpush1.msra.mxu0 0.0
        %884 = vmatprep.subr.mxu0 0.0
        %885 = vmatpush1.msra.mxu0 0.0
        %886 = vmatprep.subr.mxu0 0.0
        %887 = vmatpush1.msra.mxu0 0.0
        %888 = vmatprep.subr.mxu0 0.0
        %889 = vmatpush1.msra.mxu0 0.0
        %890 = vmatprep.subr.mxu0 0.0
        %891 = vmatpush1.msra.mxu0 0.0
        %892 = vmatprep.subr.mxu0 0.0
        %893 = vmatpush1.msra.mxu0 0.0
        %894 = vmatprep.mubr.f32.mxu0 0.0
        %895 = vmatmul.mubr.f32.gmra.mrb[0].mxu0 %v828
        %v896 = vpop.f32.mrb[0].mxu0
        %v897 = vadd.f32 0.0, %v896
        %v898 = vpop.f32.mrb[0].mxu0
        %899 = vdwg.mxu0
        %v900 = vrcp.pop %v823
        %v901 = vmul.f32 %v897, %v900
        %902 = vrot.lane.b32.xlu0 %v569, 112
        %v903 = vpop.permute.xlu0 %902
        %904 = vrot.lane.b32.xlu0 %v569, 80
        %v905 = vpop.permute.xlu0 %904
        %v906 = vsel %vm575, %v903, 0
        %v908 = vsel %vm575, %v905, 0
        %910 = vmatprep.subr.mxu0 0.0
        %911 = vmatpush1.xpose.msra.mxu0 %v908
        %912 = vmatprep.subr.mxu0 0.0
        %913 = vmatpush1.xpose.msra.mxu0 0.0
        %914 = vmatprep.subr.mxu0 0.0
        %915 = vmatpush1.xpose.msra.mxu0 0.0
        %916 = vmatprep.subr.mxu0 0.0
        %917 = vmatpush1.xpose.msra.mxu0 0.0
        %918 = vmatprep.subr.mxu0 0.0
        %919 = vmatpush1.xpose.msra.mxu0 0.0
        %920 = vmatprep.subr.mxu0 0.0
        %921 = vmatpush1.xpose.msra.mxu0 0.0
        %922 = vmatprep.subr.mxu0 0.0
        %923 = vmatpush1.xpose.msra.mxu0 0.0
        %924 = vmatprep.subr.mxu0 0.0
        %925 = vmatpush1.xpose.msra.mxu0 0.0
        %926 = vmatprep.subr.mxu0 0.0
        %927 = vmatpush1.xpose.msra.mxu0 0.0
        %928 = vmatprep.subr.mxu0 0.0
        %929 = vmatpush1.xpose.msra.mxu0 0.0
        %930 = vmatprep.subr.mxu0 0.0
        %931 = vmatpush1.xpose.msra.mxu0 0.0
        %932 = vmatprep.subr.mxu0 0.0
        %933 = vmatpush1.xpose.msra.mxu0 0.0
        %934 = vmatprep.subr.mxu0 0.0
        %935 = vmatpush1.xpose.msra.mxu0 0.0
        %936 = vmatprep.subr.mxu0 0.0
        %937 = vmatpush1.xpose.msra.mxu0 0.0
        %938 = vmatprep.subr.mxu0 0.0
        %939 = vmatpush1.xpose.msra.mxu0 0.0
        %940 = vmatprep.subr.mxu0 0.0
        %941 = vmatpush1.xpose.msra.mxu0 0.0
        %942 = vmatprep.subr.mxu0 0.0
        %943 = vmatpush1.xpose.msra.mxu0 0.0
        %944 = vmatprep.subr.mxu0 0.0
        %945 = vmatpush1.xpose.msra.mxu0 0.0
        %946 = vmatprep.subr.mxu0 0.0
        %947 = vmatpush1.xpose.msra.mxu0 0.0
        %948 = vmatprep.subr.mxu0 0.0
        %949 = vmatpush1.xpose.msra.mxu0 0.0
        %950 = vmatprep.subr.mxu0 0.0
        %951 = vmatpush1.xpose.msra.mxu0 0.0
        %952 = vmatprep.subr.mxu0 0.0
        %953 = vmatpush1.xpose.msra.mxu0 0.0
        %954 = vmatprep.subr.mxu0 0.0
        %955 = vmatpush1.xpose.msra.mxu0 0.0
        %956 = vmatprep.subr.mxu0 0.0
        %957 = vmatpush1.xpose.msra.mxu0 0.0
        %958 = vmatprep.subr.mxu0 0.0
        %959 = vmatpush1.xpose.msra.mxu0 0.0
        %960 = vmatprep.subr.mxu0 0.0
        %961 = vmatpush1.xpose.msra.mxu0 0.0
        %962 = vmatprep.subr.mxu0 0.0
        %963 = vmatpush1.xpose.msra.mxu0 0.0
        %964 = vmatprep.subr.mxu0 0.0
        %965 = vmatpush1.xpose.msra.mxu0 0.0
        %966 = vmatprep.subr.mxu0 0.0
        %967 = vmatpush1.xpose.msra.mxu0 0.0
        %968 = vmatprep.subr.mxu0 0.0
        %969 = vmatpush1.xpose.msra.mxu0 0.0
        %970 = vmatprep.subr.mxu0 0.0
        %971 = vmatpush1.xpose.msra.mxu0 0.0
        %972 = vmatprep.subr.mxu0 0.0
        %973 = vmatpush1.xpose.msra.mxu0 0.0
        %974 = vmatprep.mubr.f32.mxu0 0.0
        %975 = vmatmul.mubr.f32.gmra.mrb[0].mxu0 %v906
        %v976 = vpop.f32.mrb[0].mxu0
        %v977 = vadd.f32 0.0, %v976
        %v978 = vpop.f32.mrb[0].mxu0
        %979 = vdwg.mxu0
        %v980 = vsel %vm575, %v977, -inf
        %981 = vmax.xlane.f32.xlu0 %v980
        %v982 = vpop.xlane.xlu0 %981
        %v983 = vsub.f32 %v977, %v982
        %v984 = vmul.f32 %v983, 1.442695
        %v985 = vpow.pop %v984
        %v986 = vsel %vm575, %v985, 0.0
        %987 = vadd.xlane.f32.xlu0 %v986
        %v988 = vpop.xlane.xlu0 %987
        %989 = vrot.lane.b32.xlu0 %v569, 48
        %v990 = vpop.permute.xlu0 %989
        %v993 = vsel %vm575, %v985, 0
        %995 = vmatprep.subr.mxu0 0.0
        %996 = vmatpush1.msra.mxu0 %v990
        %997 = vmatprep.subr.mxu0 0.0
        %998 = vmatpush1.msra.mxu0 0.0
        %999 = vmatprep.subr.mxu0 0.0
        %1000 = vmatpush1.msra.mxu0 0.0
        %1001 = vmatprep.subr.mxu0 0.0
        %1002 = vmatpush1.msra.mxu0 0.0
        %1003 = vmatprep.subr.mxu0 0.0
        %1004 = vmatpush1.msra.mxu0 0.0
        %1005 = vmatprep.subr.mxu0 0.0
        %1006 = vmatpush1.msra.mxu0 0.0
        %1007 = vmatprep.subr.mxu0 0.0
        %1008 = vmatpush1.msra.mxu0 0.0
        %1009 = vmatprep.subr.mxu0 0.0
        %1010 = vmatpush1.msra.mxu0 0.0
        %1011 = vmatprep.subr.mxu0 0.0
        %1012 = vmatpush1.msra.mxu0 0.0
        %1013 = vmatprep.subr.mxu0 0.0
        %1014 = vmatpush1.msra.mxu0 0.0
        %1015 = vmatprep.subr.mxu0 0.0
        %1016 = vmatpush1.msra.mxu0 0.0
        %1017 = vmatprep.subr.mxu0 0.0
        %1018 = vmatpush1.msra.mxu0 0.0
        %1019 = vmatprep.subr.mxu0 0.0
        %1020 = vmatpush1.msra.mxu0 0.0
        %1021 = vmatprep.subr.mxu0 0.0
        %1022 = vmatpush1.msra.mxu0 0.0
        %1023 = vmatprep.subr.mxu0 0.0
        %1024 = vmatpush1.msra.mxu0 0.0
        %1025 = vmatprep.subr.mxu0 0.0
        %1026 = vmatpush1.msra.mxu0 0.0
        %1027 = vmatprep.subr.mxu0 0.0
        %1028 = vmatpush1.msra.mxu0 0.0
        %1029 = vmatprep.subr.mxu0 0.0
        %1030 = vmatpush1.msra.mxu0 0.0
        %1031 = vmatprep.subr.mxu0 0.0
        %1032 = vmatpush1.msra.mxu0 0.0
        %1033 = vmatprep.subr.mxu0 0.0
        %1034 = vmatpush1.msra.mxu0 0.0
        %1035 = vmatprep.subr.mxu0 0.0
        %1036 = vmatpush1.msra.mxu0 0.0
        %1037 = vmatprep.subr.mxu0 0.0
        %1038 = vmatpush1.msra.mxu0 0.0
        %1039 = vmatprep.subr.mxu0 0.0
        %1040 = vmatpush1.msra.mxu0 0.0
        %1041 = vmatprep.subr.mxu0 0.0
        %1042 = vmatpush1.msra.mxu0 0.0
        %1043 = vmatprep.subr.mxu0 0.0
        %1044 = vmatpush1.msra.mxu0 0.0
        %1045 = vmatprep.subr.mxu0 0.0
        %1046 = vmatpush1.msra.mxu0 0.0
        %1047 = vmatprep.subr.mxu0 0.0
        %1048 = vmatpush1.msra.mxu0 0.0
        %1049 = vmatprep.subr.mxu0 0.0
        %1050 = vmatpush1.msra.mxu0 0.0
        %1051 = vmatprep.subr.mxu0 0.0
        %1052 = vmatpush1.msra.mxu0 0.0
        %1053 = vmatprep.subr.mxu0 0.0
        %1054 = vmatpush1.msra.mxu0 0.0
        %1055 = vmatprep.subr.mxu0 0.0
        %1056 = vmatpush1.msra.mxu0 0.0
        %1057 = vmatprep.subr.mxu0 0.0
        %1058 = vmatpush1.msra.mxu0 0.0
        %1059 = vmatprep.mubr.f32.mxu0 0.0
        %1060 = vmatmul.mubr.f32.gmra.mrb[0].mxu0 %v993
        %v1061 = vpop.f32.mrb[0].mxu0
        %v1062 = vadd.f32 0.0, %v1061
        %v1063 = vpop.f32.mrb[0].mxu0
        %1064 = vdwg.mxu0
        %v1065 = vrcp.pop %v988
        %v1066 = vmul.f32 %v1062, %v1065
        %1067 = vrot.lane.b32.xlu0 %v569, 104
        %v1068 = vpop.permute.xlu0 %1067
        %1069 = vrot.lane.b32.xlu0 %v569, 72
        %v1070 = vpop.permute.xlu0 %1069
        %v1071 = vsel %vm575, %v1068, 0
        %v1073 = vsel %vm575, %v1070, 0
        %1075 = vmatprep.subr.mxu0 0.0
        %1076 = vmatpush1.xpose.msra.mxu0 %v1073
        %1077 = vmatprep.subr.mxu0 0.0
        %1078 = vmatpush1.xpose.msra.mxu0 0.0
        %1079 = vmatprep.subr.mxu0 0.0
        %1080 = vmatpush1.xpose.msra.mxu0 0.0
        %1081 = vmatprep.subr.mxu0 0.0
        %1082 = vmatpush1.xpose.msra.mxu0 0.0
        %1083 = vmatprep.subr.mxu0 0.0
        %1084 = vmatpush1.xpose.msra.mxu0 0.0
        %1085 = vmatprep.subr.mxu0 0.0
        %1086 = vmatpush1.xpose.msra.mxu0 0.0
        %1087 = vmatprep.subr.mxu0 0.0
        %1088 = vmatpush1.xpose.msra.mxu0 0.0
        %1089 = vmatprep.subr.mxu0 0.0
        %1090 = vmatpush1.xpose.msra.mxu0 0.0
        %1091 = vmatprep.subr.mxu0 0.0
        %1092 = vmatpush1.xpose.msra.mxu0 0.0
        %1093 = vmatprep.subr.mxu0 0.0
        %1094 = vmatpush1.xpose.msra.mxu0 0.0
        %1095 = vmatprep.subr.mxu0 0.0
        %1096 = vmatpush1.xpose.msra.mxu0 0.0
        %1097 = vmatprep.subr.mxu0 0.0
        %1098 = vmatpush1.xpose.msra.mxu0 0.0
        %1099 = vmatprep.subr.mxu0 0.0
        %1100 = vmatpush1.xpose.msra.mxu0 0.0
        %1101 = vmatprep.subr.mxu0 0.0
        %1102 = vmatpush1.xpose.msra.mxu0 0.0
        %1103 = vmatprep.subr.mxu0 0.0
        %1104 = vmatpush1.xpose.msra.mxu0 0.0
        %1105 = vmatprep.subr.mxu0 0.0
        %1106 = vmatpush1.xpose.msra.mxu0 0.0
        %1107 = vmatprep.subr.mxu0 0.0
        %1108 = vmatpush1.xpose.msra.mxu0 0.0
        %1109 = vmatprep.subr.mxu0 0.0
        %1110 = vmatpush1.xpose.msra.mxu0 0.0
        %1111 = vmatprep.subr.mxu0 0.0
        %1112 = vmatpush1.xpose.msra.mxu0 0.0
        %1113 = vmatprep.subr.mxu0 0.0
        %1114 = vmatpush1.xpose.msra.mxu0 0.0
        %1115 = vmatprep.subr.mxu0 0.0
        %1116 = vmatpush1.xpose.msra.mxu0 0.0
        %1117 = vmatprep.subr.mxu0 0.0
        %1118 = vmatpush1.xpose.msra.mxu0 0.0
        %1119 = vmatprep.subr.mxu0 0.0
        %1120 = vmatpush1.xpose.msra.mxu0 0.0
        %1121 = vmatprep.subr.mxu0 0.0
        %1122 = vmatpush1.xpose.msra.mxu0 0.0
        %1123 = vmatprep.subr.mxu0 0.0
        %1124 = vmatpush1.xpose.msra.mxu0 0.0
        %1125 = vmatprep.subr.mxu0 0.0
        %1126 = vmatpush1.xpose.msra.mxu0 0.0
        %1127 = vmatprep.subr.mxu0 0.0
        %1128 = vmatpush1.xpose.msra.mxu0 0.0
        %1129 = vmatprep.subr.mxu0 0.0
        %1130 = vmatpush1.xpose.msra.mxu0 0.0
        %1131 = vmatprep.subr.mxu0 0.0
        %1132 = vmatpush1.xpose.msra.mxu0 0.0
        %1133 = vmatprep.subr.mxu0 0.0
        %1134 = vmatpush1.xpose.msra.mxu0 0.0
        %1135 = vmatprep.subr.mxu0 0.0
        %1136 = vmatpush1.xpose.msra.mxu0 0.0
        %1137 = vmatprep.subr.mxu0 0.0
        %1138 = vmatpush1.xpose.msra.mxu0 0.0
        %1139 = vmatprep.mubr.f32.mxu0 0.0
        %1140 = vmatmul.mubr.f32.gmra.mrb[0].mxu0 %v1071
        %v1141 = vpop.f32.mrb[0].mxu0
        %v1142 = vadd.f32 0.0, %v1141
        %v1143 = vpop.f32.mrb[0].mxu0
        %1144 = vdwg.mxu0
        %v1145 = vsel %vm575, %v1142, -inf
        %1146 = vmax.xlane.f32.xlu0 %v1145
        %v1147 = vpop.xlane.xlu0 %1146
        %v1148 = vsub.f32 %v1142, %v1147
        %v1149 = vmul.f32 %v1148, 1.442695
        %v1150 = vpow.pop %v1149
        %v1151 = vsel %vm575, %v1150, 0.0
        %1152 = vadd.xlane.f32.xlu0 %v1151
        %v1153 = vpop.xlane.xlu0 %1152
        %1154 = vrot.lane.b32.xlu0 %v569, 40
        %v1155 = vpop.permute.xlu0 %1154
        %v1158 = vsel %vm575, %v1150, 0
        %1160 = vmatprep.subr.mxu0 0.0
        %1161 = vmatpush1.msra.mxu0 %v1155
        %1162 = vmatprep.subr.mxu0 0.0
        %1163 = vmatpush1.msra.mxu0 0.0
        %1164 = vmatprep.subr.mxu0 0.0
        %1165 = vmatpush1.msra.mxu0 0.0
        %1166 = vmatprep.subr.mxu0 0.0
        %1167 = vmatpush1.msra.mxu0 0.0
        %1168 = vmatprep.subr.mxu0 0.0
        %1169 = vmatpush1.msra.mxu0 0.0
        %1170 = vmatprep.subr.mxu0 0.0
        %1171 = vmatpush1.msra.mxu0 0.0
        %1172 = vmatprep.subr.mxu0 0.0
        %1173 = vmatpush1.msra.mxu0 0.0
        %1174 = vmatprep.subr.mxu0 0.0
        %1175 = vmatpush1.msra.mxu0 0.0
        %1176 = vmatprep.subr.mxu0 0.0
        %1177 = vmatpush1.msra.mxu0 0.0
        %1178 = vmatprep.subr.mxu0 0.0
        %1179 = vmatpush1.msra.mxu0 0.0
        %1180 = vmatprep.subr.mxu0 0.0
        %1181 = vmatpush1.msra.mxu0 0.0
        %1182 = vmatprep.subr.mxu0 0.0
        %1183 = vmatpush1.msra.mxu0 0.0
        %1184 = vmatprep.subr.mxu0 0.0
        %1185 = vmatpush1.msra.mxu0 0.0
        %1186 = vmatprep.subr.mxu0 0.0
        %1187 = vmatpush1.msra.mxu0 0.0
        %1188 = vmatprep.subr.mxu0 0.0
        %1189 = vmatpush1.msra.mxu0 0.0
        %1190 = vmatprep.subr.mxu0 0.0
        %1191 = vmatpush1.msra.mxu0 0.0
        %1192 = vmatprep.subr.mxu0 0.0
        %1193 = vmatpush1.msra.mxu0 0.0
        %1194 = vmatprep.subr.mxu0 0.0
        %1195 = vmatpush1.msra.mxu0 0.0
        %1196 = vmatprep.subr.mxu0 0.0
        %1197 = vmatpush1.msra.mxu0 0.0
        %1198 = vmatprep.subr.mxu0 0.0
        %1199 = vmatpush1.msra.mxu0 0.0
        %1200 = vmatprep.subr.mxu0 0.0
        %1201 = vmatpush1.msra.mxu0 0.0
        %1202 = vmatprep.subr.mxu0 0.0
        %1203 = vmatpush1.msra.mxu0 0.0
        %1204 = vmatprep.subr.mxu0 0.0
        %1205 = vmatpush1.msra.mxu0 0.0
        %1206 = vmatprep.subr.mxu0 0.0
        %1207 = vmatpush1.msra.mxu0 0.0
        %1208 = vmatprep.subr.mxu0 0.0
        %1209 = vmatpush1.msra.mxu0 0.0
        %1210 = vmatprep.subr.mxu0 0.0
        %1211 = vmatpush1.msra.mxu0 0.0
        %1212 = vmatprep.subr.mxu0 0.0
        %1213 = vmatpush1.msra.mxu0 0.0
        %1214 = vmatprep.subr.mxu0 0.0
        %1215 = vmatpush1.msra.mxu0 0.0
        %1216 = vmatprep.subr.mxu0 0.0
        %1217 = vmatpush1.msra.mxu0 0.0
        %1218 = vmatprep.subr.mxu0 0.0
        %1219 = vmatpush1.msra.mxu0 0.0
        %1220 = vmatprep.subr.mxu0 0.0
        %1221 = vmatpush1.msra.mxu0 0.0
        %1222 = vmatprep.subr.mxu0 0.0
        %1223 = vmatpush1.msra.mxu0 0.0
        %1224 = vmatprep.mubr.f32.mxu0 0.0
        %1225 = vmatmul.mubr.f32.gmra.mrb[0].mxu0 %v1158
        %v1226 = vpop.f32.mrb[0].mxu0
        %v1227 = vadd.f32 0.0, %v1226
        %v1228 = vpop.f32.mrb[0].mxu0
        %1229 = vdwg.mxu0
        %v1230 = vrcp.pop %v1153
        %v1231 = vmul.f32 %v1227, %v1230
        %1233 = vrot.lane.b32.xlu0 %v901, 8
        %v1234 = vpop.permute.xlu0 %1233
        %1237 = vrot.lane.b32.xlu0 %v1066, 16
        %v1238 = vpop.permute.xlu0 %1237
        %1241 = vrot.lane.b32.xlu0 %v1231, 24
        %v1242 = vpop.permute.xlu0 %1241
        %v1244 = vsel %vm575, %v736, %v1234
        %vm1245 = vcmask 130048
        %v1246 = vsel %vm1245, %v1244, %v1238
        %vm1247 = vcmask 195584
        %v1248 = vsel %vm1247, %v1246, %v1242
        %v1249 = vld [vmem:[%s5] sm:$0xff]
        %v1250 = vld [vmem:[%s5 + $0x8] sm:$0xff]
        %v1251 = vld [vmem:[%s5 + $0x10] sm:$0xff]
        %v1252 = vld [vmem:[%s5 + $0x18] sm:$0xff]
        %v1253 = vld [vmem:[%s6] sm:$0x1]
        %v1255 = vlaneseq
        %v1256 = vshrl.u32 %v1255, 7
        %v1257 = vsub.s32 0, %v1256
        %v1258 = vrot.slane %v1253, %v1257
        %v1261 = vsel %vm459, %v1248, 0
        %1263 = vmatprep.subr.mxu0 0.0
        %1264 = vmatpush1.msra.mxu0 %v1249
        %1265 = vmatprep.subr.mxu0 0.0
        %1266 = vmatpush1.msra.mxu0 %v1250
        %1267 = vmatprep.subr.mxu0 0.0
        %1268 = vmatpush1.msra.mxu0 %v1251
        %1269 = vmatprep.subr.mxu0 0.0
        %1270 = vmatpush1.msra.mxu0 %v1252
        %1271 = vmatprep.subr.mxu0 0.0
        %1272 = vmatpush1.msra.mxu0 0.0
        %1273 = vmatprep.subr.mxu0 0.0
        %1274 = vmatpush1.msra.mxu0 0.0
        %1275 = vmatprep.subr.mxu0 0.0
        %1276 = vmatpush1.msra.mxu0 0.0
        %1277 = vmatprep.subr.mxu0 0.0
        %1278 = vmatpush1.msra.mxu0 0.0
        %1279 = vmatprep.subr.mxu0 0.0
        %1280 = vmatpush1.msra.mxu0 0.0
        %1281 = vmatprep.subr.mxu0 0.0
        %1282 = vmatpush1.msra.mxu0 0.0
        %1283 = vmatprep.subr.mxu0 0.0
        %1284 = vmatpush1.msra.mxu0 0.0
        %1285 = vmatprep.subr.mxu0 0.0
        %1286 = vmatpush1.msra.mxu0 0.0
        %1287 = vmatprep.subr.mxu0 0.0
        %1288 = vmatpush1.msra.mxu0 0.0
        %1289 = vmatprep.subr.mxu0 0.0
        %1290 = vmatpush1.msra.mxu0 0.0
        %1291 = vmatprep.subr.mxu0 0.0
        %1292 = vmatpush1.msra.mxu0 0.0
        %1293 = vmatprep.subr.mxu0 0.0
        %1294 = vmatpush1.msra.mxu0 0.0
        %1295 = vmatprep.subr.mxu0 0.0
        %1296 = vmatpush1.msra.mxu0 0.0
        %1297 = vmatprep.subr.mxu0 0.0
        %1298 = vmatpush1.msra.mxu0 0.0
        %1299 = vmatprep.subr.mxu0 0.0
        %1300 = vmatpush1.msra.mxu0 0.0
        %1301 = vmatprep.subr.mxu0 0.0
        %1302 = vmatpush1.msra.mxu0 0.0
        %1303 = vmatprep.subr.mxu0 0.0
        %1304 = vmatpush1.msra.mxu0 0.0
        %1305 = vmatprep.subr.mxu0 0.0
        %1306 = vmatpush1.msra.mxu0 0.0
        %1307 = vmatprep.subr.mxu0 0.0
        %1308 = vmatpush1.msra.mxu0 0.0
        %1309 = vmatprep.subr.mxu0 0.0
        %1310 = vmatpush1.msra.mxu0 0.0
        %1311 = vmatprep.subr.mxu0 0.0
        %1312 = vmatpush1.msra.mxu0 0.0
        %1313 = vmatprep.subr.mxu0 0.0
        %1314 = vmatpush1.msra.mxu0 0.0
        %1315 = vmatprep.subr.mxu0 0.0
        %1316 = vmatpush1.msra.mxu0 0.0
        %1317 = vmatprep.subr.mxu0 0.0
        %1318 = vmatpush1.msra.mxu0 0.0
        %1319 = vmatprep.subr.mxu0 0.0
        %1320 = vmatpush1.msra.mxu0 0.0
        %1321 = vmatprep.subr.mxu0 0.0
        %1322 = vmatpush1.msra.mxu0 0.0
        %1323 = vmatprep.subr.mxu0 0.0
        %1324 = vmatpush1.msra.mxu0 0.0
        %1325 = vmatprep.subr.mxu0 0.0
        %1326 = vmatpush1.msra.mxu0 0.0
        %1327 = vmatprep.mubr.f32.mxu0 0.0
        %1328 = vmatmul.mubr.f32.gmra.mrb[0].mxu0 %v1261
        %v1329 = vpop.f32.mrb[0].mxu0
        %v1330 = vadd.f32 %v1258, %v1329
        %v1331 = vpop.f32.mrb[0].mxu0
        %1332 = vdwg.mxu0
        %v1333 = vadd.f32 %v456, %v1330
        %v1334 = vld [vmem:[%s7] sm:$0x1]
        %v1335 = vld [vmem:[%s8] sm:$0x1]
        %v1336 = vsel %vm459, %v1333, 0.0
        %1337 = vadd.xlane.f32.xlu0 %v1336
        %v1338 = vpop.xlane.xlu0 %1337
        %v1339 = vmul.f32 %v1338, %v463
        %v1340 = vsub.f32 %v1333, %v1339
        %v1341 = vmul.f32 %v1340, %v1340
        %v1342 = vsel %vm459, %v1341, 0.0
        %1343 = vadd.xlane.f32.xlu0 %v1342
        %v1344 = vpop.xlane.xlu0 %1343
        %v1345 = vmul.f32 %v1344, %v463
        %v1346 = vadd.f32 %v1345, 1e-05
        %v1347 = vrsqrt.pop %v1346
        %v1348 = vmul.f32 %v1340, %v1347
        %v1350 = vlaneseq
        %v1351 = vshrl.u32 %v1350, 7
        %v1352 = vsub.s32 0, %v1351
        %v1353 = vrot.slane %v1334, %v1352
        %v1355 = vmul.f32 %v1348, %v1353
        %v1357 = vlaneseq
        %v1358 = vshrl.u32 %v1357, 7
        %v1359 = vsub.s32 0, %v1358
        %v1360 = vrot.slane %v1335, %v1359
        %v1362 = vadd.f32 %v1355, %v1360
        %v1363 = vld [vmem:[%s9] sm:$0xff]
        %v1364 = vld [vmem:[%s9 + $0x8] sm:$0xff]
        %v1365 = vld [vmem:[%s9 + $0x10] sm:$0xff]
        %v1366 = vld [vmem:[%s9 + $0x18] sm:$0xff]
        %v1367 = vld [vmem:[%s10] sm:$0x1]
        %v1369 = vlaneseq
        %v1370 = vshrl.u32 %v1369, 7
        %v1371 = vsub.s32 0, %v1370
        %v1372 = vrot.slane %v1367, %v1371
        %v1375 = vsel %vm459, %v1362, 0
        %1377 = vmatprep.subr.mxu0 0.0
        %1378 = vmatpush1.msra.mxu0 %v1363
        %1379 = vmatprep.subr.mxu0 0.0
        %1380 = vmatpush1.msra.mxu0 %v1364
        %1381 = vmatprep.subr.mxu0 0.0
        %1382 = vmatpush1.msra.mxu0 %v1365
        %1383 = vmatprep.subr.mxu0 0.0
        %1384 = vmatpush1.msra.mxu0 %v1366
        %1385 = vmatprep.subr.mxu0 0.0
        %1386 = vmatpush1.msra.mxu0 0.0
        %1387 = vmatprep.subr.mxu0 0.0
        %1388 = vmatpush1.msra.mxu0 0.0
        %1389 = vmatprep.subr.mxu0 0.0
        %1390 = vmatpush1.msra.mxu0 0.0
        %1391 = vmatprep.subr.mxu0 0.0
        %1392 = vmatpush1.msra.mxu0 0.0
        %1393 = vmatprep.subr.mxu0 0.0
        %1394 = vmatpush1.msra.mxu0 0.0
        %1395 = vmatprep.subr.mxu0 0.0
        %1396 = vmatpush1.msra.mxu0 0.0
        %1397 = vmatprep.subr.mxu0 0.0
        %1398 = vmatpush1.msra.mxu0 0.0
        %1399 = vmatprep.subr.mxu0 0.0
        %1400 = vmatpush1.msra.mxu0 0.0
        %1401 = vmatprep.subr.mxu0 0.0
        %1402 = vmatpush1.msra.mxu0 0.0
        %1403 = vmatprep.subr.mxu0 0.0
        %1404 = vmatpush1.msra.mxu0 0.0
        %1405 = vmatprep.subr.mxu0 0.0
        %1406 = vmatpush1.msra.mxu0 0.0
        %1407 = vmatprep.subr.mxu0 0.0
        %1408 = vmatpush1.msra.mxu0 0.0
        %1409 = vmatprep.subr.mxu0 0.0
        %1410 = vmatpush1.msra.mxu0 0.0
        %1411 = vmatprep.subr.mxu0 0.0
        %1412 = vmatpush1.msra.mxu0 0.0
        %1413 = vmatprep.subr.mxu0 0.0
        %1414 = vmatpush1.msra.mxu0 0.0
        %1415 = vmatprep.subr.mxu0 0.0
        %1416 = vmatpush1.msra.mxu0 0.0
        %1417 = vmatprep.subr.mxu0 0.0
        %1418 = vmatpush1.msra.mxu0 0.0
        %1419 = vmatprep.subr.mxu0 0.0
        %1420 = vmatpush1.msra.mxu0 0.0
        %1421 = vmatprep.subr.mxu0 0.0
        %1422 = vmatpush1.msra.mxu0 0.0
        %1423 = vmatprep.subr.mxu0 0.0
        %1424 = vmatpush1.msra.mxu0 0.0
        %1425 = vmatprep.subr.mxu0 0.0
        %1426 = vmatpush1.msra.mxu0 0.0
        %1427 = vmatprep.subr.mxu0 0.0
        %1428 = vmatpush1.msra.mxu0 0.0
        %1429 = vmatprep.subr.mxu0 0.0
        %1430 = vmatpush1.msra.mxu0 0.0
        %1431 = vmatprep.subr.mxu0 0.0
        %1432 = vmatpush1.msra.mxu0 0.0
        %1433 = vmatprep.subr.mxu0 0.0
        %1434 = vmatpush1.msra.mxu0 0.0
        %1435 = vmatprep.subr.mxu0 0.0
        %1436 = vmatpush1.msra.mxu0 0.0
        %1437 = vmatprep.subr.mxu0 0.0
        %1438 = vmatpush1.msra.mxu0 0.0
        %1439 = vmatprep.subr.mxu0 0.0
        %1440 = vmatpush1.msra.mxu0 0.0
        %1441 = vmatprep.mubr.f32.mxu0 0.0
        %1442 = vmatmul.mubr.f32.gmra.mrb[0].mxu0 %v1375
        %v1443 = vpop.f32.mrb[0].mxu0
        %v1444 = vadd.f32 %v1372, %v1443
        %v1445 = vpop.f32.mrb[0].mxu0
        %1446 = vdwg.mxu0
        %v1447 = vmul.f32 %v1444, 0.5
        %v1448 = vmul.f32 %v1444, 0.70710677
        %v1449 = verf.f32.pop %v1448
        %v1450 = vadd.f32 %v1449, 1.0
        %v1451 = vmul.f32 %v1447, %v1450
        %v1452 = vld [vmem:[%s11] sm:$0xff]
        %v1453 = vld [vmem:[%s11 + $0x8] sm:$0xff]
        %v1454 = vld [vmem:[%s11 + $0x10] sm:$0xff]
        %v1455 = vld [vmem:[%s11 + $0x18] sm:$0xff]
        %v1456 = vld [vmem:[%s11 + $0x20] sm:$0xff]
        %v1457 = vld [vmem:[%s11 + $0x28] sm:$0xff]
        %v1458 = vld [vmem:[%s11 + $0x30] sm:$0xff]
        %v1459 = vld [vmem:[%s11 + $0x38] sm:$0xff]
        %v1460 = vld [vmem:[%s12] sm:$0x1]
        %v1462 = vlaneseq
        %v1463 = vshrl.u32 %v1462, 7
        %v1464 = vsub.s32 0, %v1463
        %v1465 = vrot.slane %v1460, %v1464
        %vm1467 = vcmask 523264
        %v1469 = vsel %vm1467, %v1451, 0
        %1471 = vmatprep.subr.mxu0 0.0
        %1472 = vmatpush1.msra.mxu0 %v1452
        %1473 = vmatprep.subr.mxu0 0.0
        %1474 = vmatpush1.msra.mxu0 %v1453
        %1475 = vmatprep.subr.mxu0 0.0
        %1476 = vmatpush1.msra.mxu0 %v1454
        %1477 = vmatprep.subr.mxu0 0.0
        %1478 = vmatpush1.msra.mxu0 %v1455
        %1479 = vmatprep.subr.mxu0 0.0
        %1480 = vmatpush1.msra.mxu0 %v1456
        %1481 = vmatprep.subr.mxu0 0.0
        %1482 = vmatpush1.msra.mxu0 %v1457
        %1483 = vmatprep.subr.mxu0 0.0
        %1484 = vmatpush1.msra.mxu0 %v1458
        %1485 = vmatprep.subr.mxu0 0.0
        %1486 = vmatpush1.msra.mxu0 %v1459
        %1487 = vmatprep.subr.mxu0 0.0
        %1488 = vmatpush1.msra.mxu0 0.0
        %1489 = vmatprep.subr.mxu0 0.0
        %1490 = vmatpush1.msra.mxu0 0.0
        %1491 = vmatprep.subr.mxu0 0.0
        %1492 = vmatpush1.msra.mxu0 0.0
        %1493 = vmatprep.subr.mxu0 0.0
        %1494 = vmatpush1.msra.mxu0 0.0
        %1495 = vmatprep.subr.mxu0 0.0
        %1496 = vmatpush1.msra.mxu0 0.0
        %1497 = vmatprep.subr.mxu0 0.0
        %1498 = vmatpush1.msra.mxu0 0.0
        %1499 = vmatprep.subr.mxu0 0.0
        %1500 = vmatpush1.msra.mxu0 0.0
        %1501 = vmatprep.subr.mxu0 0.0
        %1502 = vmatpush1.msra.mxu0 0.0
        %1503 = vmatprep.subr.mxu0 0.0
        %1504 = vmatpush1.msra.mxu0 0.0
        %1505 = vmatprep.subr.mxu0 0.0
        %1506 = vmatpush1.msra.mxu0 0.0
        %1507 = vmatprep.subr.mxu0 0.0
        %1508 = vmatpush1.msra.mxu0 0.0
        %1509 = vmatprep.subr.mxu0 0.0
        %1510 = vmatpush1.msra.mxu0 0.0
        %1511 = vmatprep.subr.mxu0 0.0
        %1512 = vmatpush1.msra.mxu0 0.0
        %1513 = vmatprep.subr.mxu0 0.0
        %1514 = vmatpush1.msra.mxu0 0.0
        %1515 = vmatprep.subr.mxu0 0.0
        %1516 = vmatpush1.msra.mxu0 0.0
        %1517 = vmatprep.subr.mxu0 0.0
        %1518 = vmatpush1.msra.mxu0 0.0
        %1519 = vmatprep.subr.mxu0 0.0
        %1520 = vmatpush1.msra.mxu0 0.0
        %1521 = vmatprep.subr.mxu0 0.0
        %1522 = vmatpush1.msra.mxu0 0.0
        %1523 = vmatprep.subr.mxu0 0.0
        %1524 = vmatpush1.msra.mxu0 0.0
        %1525 = vmatprep.subr.mxu0 0.0
        %1526 = vmatpush1.msra.mxu0 0.0
        %1527 = vmatprep.subr.mxu0 0.0
        %1528 = vmatpush1.msra.mxu0 0.0
        %1529 = vmatprep.subr.mxu0 0.0
        %1530 = vmatpush1.msra.mxu0 0.0
        %1531 = vmatprep.subr.mxu0 0.0
        %1532 = vmatpush1.msra.mxu0 0.0
        %1533 = vmatprep.subr.mxu0 0.0
        %1534 = vmatpush1.msra.mxu0 0.0
        %1535 = vmatprep.mubr.f32.mxu0 0.0
        %1536 = vmatmul.mubr.f32.gmra.mrb[0].mxu0 %v1469
        %v1537 = vpop.f32.mrb[0].mxu0
        %v1538 = vadd.f32 %v1465, %v1537
        %v1539 = vpop.f32.mrb[0].mxu0
        %1540 = vdwg.mxu0
        %v1541 = vadd.f32 %v1333, %v1538
        %1542 = vst.msk [vmem:[%s455] sm:$0xff] %vm459, %v1541
        %s1543 = sand.u32 %s316, 1
        %s1544 = scalar_lea.sflag [#allocation4], %s1543
        %s1545 = sand.u32 %s316, 1
        %s1546 = smul.addr %s1545, 8
        %s1547 = scalar_lea.vmem [#allocation5], %s1546
        // Predicated region
        $region77: #{tpu_custom_call.1} parent=71 // pred_check
          %p1548 = pneg %p326
        $region78: #{tpu_custom_call.1} parent=71 // pred_check_branch
          %1550 = sbr.rel (%p1548) target = $region80
        $region79: #{tpu_custom_call.1} parent=71 // pred_region
          %s1552 = ssub.s32 128, 128
          %1553 = vsyncadd %s1544, %s1552
          %s1554 = smul.addr %s30, 128
          %s1555 = scalar_lea.hbm %s13, %s1554
          %s1557 = sshll.u32 %s1547, 4
          %s1558 = int_to_ptr.vmem [resolvable:$true] %s1557
          %1560 = dma.vmem_to_hbm [thread:$0]  %s1558, 128, %s1555, %s1544
        $region80: #{tpu_custom_call.1} parent=71 // pred_fallthru
          _
      $region72: #{tpu_custom_call.1} parent=5 // pred_fallthru
        _
      %p1561 = scmp.le.s32.totalorder 2, %s25
      // Predicated region
      $region81: #{tpu_custom_call.1} parent=5 // pred_check
        %p1562 = pneg %p1561
      $region82: #{tpu_custom_call.1} parent=5 // pred_check_branch
        %1564 = sbr.rel (%p1562) target = $region84
      $region83: #{tpu_custom_call.1} parent=5 // pred_region
        %s1565 = ssub.s32 %s25, 2
        // Predicated region
        $region85: #{tpu_custom_call.1} parent=83 // pred_check
          %p1566 = pneg %p332
        $region86: #{tpu_custom_call.1} parent=83 // pred_check_branch
          %1568 = sbr.rel (%p1566) target = $region88
        $region87: #{tpu_custom_call.1} parent=83 // pred_region
          %s1569 = sand.u32 %s317, 1
          %s1570 = scalar_lea.sflag [#allocation4], %s1569
          %s1571 = sand.u32 %s317, 1
          %s1572 = smul.addr %s1571, 8
          %s1573 = scalar_lea.vmem [#allocation5], %s1572
          %1574 = dma.done %s1570, 128
        $region88: #{tpu_custom_call.1} parent=83 // pred_fallthru
          _
      $region84: #{tpu_custom_call.1} parent=5 // pred_fallthru
        _
    $region6: #{tpu_custom_call.1} parent=1 // loop_footer
      %s29 = sadd.s32 1, %s25
    $region7: #{tpu_custom_call.1} parent=1 // loop_footer_branch
      %24 = sbr.rel target = $region3
    $region8: #{tpu_custom_call.1} parent=1 // loop_exit
      _
    %1575 = vsyncpa [#allocation3], 1
    %s1576 = scalar_lea.sflag [#allocation3], 1
    %1577 = vsyncpa %s1576, 1
    %1578 = vsyncpa [#allocation4], 1
    %s1579 = scalar_lea.sflag [#allocation4], 1
    %1580 = vsyncpa %s1579, 1

</llo_original>
